<compile_context>
chip_gen: v7x
topology: tpu7x:2x2x1
jax: 0.10.0
libtpu: 0.0.40
codegen_flags: <defaults>
</compile_context>

<pallas_src>
import jax
import jax.numpy as jnp
from jax.experimental import pallas as pl
from jax.experimental.pallas import tpu as pltpu

NEG_SLOPE = 0.01  # nn.LeakyReLU default


def down_block(x_nchw, params):
    """_Down forward: MaxPool2d(2) -> DoubleConv.  x_nchw: (N, Cin, H, W) f32."""
    w1, g1, beta1, rm1, rv1, w2, g2, beta2, rm2, rv2 = params
    eps = 1e-5

    # ---- fold inference BatchNorm into conv weights (scale) + per-channel shift ----
    inv1 = g1 / jnp.sqrt(rv1 + eps)
    inv2 = g2 / jnp.sqrt(rv2 + eps)
    b1 = (beta1 - rm1 * inv1)[:, None]                         # (Cmid, 1)
    b2 = (beta2 - rm2 * inv2)[:, None]                         # (Cout, 1)
    # HWIO (3,3,Cin,Cout) -> per-tap (Cout, Cin) matrices, scale folded in.
    w1f = jnp.transpose(w1, (0, 1, 3, 2)) * inv1[None, None, :, None]   # (3,3,Cmid,Cin)
    w2f = jnp.transpose(w2, (0, 1, 3, 2)) * inv2[None, None, :, None]   # (3,3,Cout,Cmid)

    N, cin, H, W = x_nchw.shape
    cmid = w1.shape[3]
    cout = w2.shape[3]
    hp, wp = H // 2, W // 2

    # ---- MaxPool2d(2): trivial mem-bound XLA prologue (not fused into the Pallas kernel) ----
    xpool = x_nchw[:, :, :hp * 2, :wp * 2].reshape(N, cin, hp, 2, wp, 2).max(axis=(3, 5))

    # ---- zero-pad by 1, flatten spatial, add a 2-element guard so all tap slices stay in-bounds
    wq = wp + 2                       # padded row width
    L = hp * wq                       # number of "output positions incl. 2 slack cols per row"
    T = (hp + 2) * wq + 2             # flat padded length (+2 guard)
    START = wq + 1                    # flat offset of interior (1,1) inside the padded plane

    xpad = jnp.pad(xpool, ((0, 0), (0, 0), (1, 1), (1, 1)))
    xflat = jnp.pad(xpad.reshape(N, cin, (hp + 2) * wq), ((0, 0), (0, 0), (0, 2)))  # (N,Cin,T)

    # mask that zeroes the 2 slack columns per row (they land on the halo border of `mid`)
    mask = (jnp.arange(L) % wq < wp).astype(jnp.float32)[None, :]   # (1, L)

    def kernel(x_ref, w1_ref, b1_ref, w2_ref, b2_ref, mask_ref, out_ref, mid_ref):
        # x_ref:   (1, Cin, T)   flat padded pooled input for one image
        # w1_ref:  (3, 3, Cmid, Cin)   BN1-scale-folded weights
        # b1_ref:  (Cmid, 1)
        # w2_ref:  (3, 3, Cout, Cmid)
        # b2_ref:  (Cout, 1)
        # mask_ref:(1, L)
        # out_ref: (1, Cout, Hp*Wp)    lane-dense output
        # mid_ref: (Cmid, T)           flat padded intermediate (VMEM scratch)

        # ---- conv1: 9 taps, each operand a contiguous lane slice of the flat input ----
        acc1 = jnp.zeros((cmid, L), dtype=jnp.float32)
        for kh in range(3):
            for kw in range(3):
                off = kh * wq + kw
                acc1 = acc1 + jnp.dot(w1_ref[kh, kw], x_ref[0, :, off:off + L],
                                      preferred_element_type=jnp.float32)
        z1 = acc1 + b1_ref[...]                               # BN1 shift (scale already folded)
        y1 = jnp.maximum(z1, NEG_SLOPE * z1) * mask_ref[...]  # LeakyReLU + zero slack columns

        # ---- intermediate padded plane: zero only the tiny halo head/tail, write interior ----
        mid_ref[:, 0:START] = jnp.zeros((cmid, START), jnp.float32)
        mid_ref[:, START + L:T] = jnp.zeros((cmid, T - START - L), jnp.float32)
        mid_ref[:, START:START + L] = y1

        # ---- conv2: same flat-slice structure over the intermediate ----
        acc2 = jnp.zeros((cout, L), dtype=jnp.float32)
        for kh in range(3):
            for kw in range(3):
                off = kh * wq + kw
                acc2 = acc2 + jnp.dot(w2_ref[kh, kw], mid_ref[:, off:off + L],
                                      preferred_element_type=jnp.float32)
        z2 = acc2 + b2_ref[...]
        y2 = jnp.maximum(z2, NEG_SLOPE * z2)                  # (Cout, L)

        # ---- compact the 2 slack columns per row into the lane-dense flat output ----
        # (row stores are fully lane-dense whenever Wp is a multiple of 128; avoids
        #  minor-dim-changing reshapes inside the kernel)
        for i in range(hp):
            out_ref[0, :, i * wp:(i + 1) * wp] = y2[:, i * wq:i * wq + wp]

    out_flat = pl.pallas_call(
        kernel,
        out_shape=jax.ShapeDtypeStruct((N, cout, hp * wp), jnp.float32),
        grid_spec=pltpu.PrefetchScalarGridSpec(
            num_scalar_prefetch=0,
            grid=(N,),
            in_specs=[
                pl.BlockSpec((1, cin, T), lambda n: (n, 0, 0)),
                pl.BlockSpec((3, 3, cmid, cin), lambda n: (0, 0, 0, 0)),
                pl.BlockSpec((cmid, 1), lambda n: (0, 0)),
                pl.BlockSpec((3, 3, cout, cmid), lambda n: (0, 0, 0, 0)),
                pl.BlockSpec((cout, 1), lambda n: (0, 0)),
                pl.BlockSpec((1, L), lambda n: (0, 0)),
            ],
            out_specs=pl.BlockSpec((1, cout, hp * wp), lambda n: (n, 0, 0)),
            scratch_shapes=[pltpu.VMEM((cmid, T), jnp.float32)],
        ),
        compiler_params=pltpu.CompilerParams(
            dimension_semantics=("parallel",),
            vmem_limit_bytes=32 * 1024 * 1024),
    )(xflat, w1f, b1, w2f, b2, mask)

    # free contiguous reshape back to NCHW (no transpose)
    return out_flat.reshape(N, cout, hp, wp)


def _reference(x_nchw, params):
    """Plain-JAX reference for _Down (maxpool + double conv) used for the correctness check."""
    w1, g1, beta1, rm1, rv1, w2, g2, beta2, rm2, rv2 = params
    eps = 1e-5
    x = jax.lax.reduce_window(x_nchw, -jnp.inf, jax.lax.max,
                              window_dimensions=(1, 1, 2, 2),
                              window_strides=(1, 1, 2, 2),
                              padding="VALID")
    x = jnp.transpose(x, (0, 2, 3, 1))  # NHWC

    def block(x, w, g, b, rm, rv):
        y = jax.lax.conv_general_dilated(
            x, w, window_strides=(1, 1), padding=((1, 1), (1, 1)),
            dimension_numbers=("NHWC", "HWIO", "NHWC"))
        y = (y - rm) / jnp.sqrt(rv + eps) * g + b
        return jnp.where(y >= 0, y, NEG_SLOPE * y)

    y = block(x, w1, g1, beta1, rm1, rv1)
    y = block(y, w2, g2, beta2, rm2, rv2)
    return jnp.transpose(y, (0, 3, 1, 2))


if __name__ == "__main__":
    key = jax.random.PRNGKey(0)
    N, Cin, H, W = 2, 4, 16, 16
    Cout = 8
    Cmid = Cout  # mid_channels defaults to out_channels

    ks = jax.random.split(key, 8)
    x = jax.random.normal(ks[0], (N, Cin, H, W), dtype=jnp.float32)

    # Conv weights in HWIO, BN params per channel (deterministic synthetic init).
    w1 = jax.random.normal(ks[1], (3, 3, Cin, Cmid), dtype=jnp.float32) * 0.2
    w2 = jax.random.normal(ks[2], (3, 3, Cmid, Cout), dtype=jnp.float32) * 0.2
    g1 = 1.0 + 0.1 * jax.random.normal(ks[3], (Cmid,), dtype=jnp.float32)
    beta1 = 0.1 * jax.random.normal(ks[4], (Cmid,), dtype=jnp.float32)
    rm1 = 0.1 * jax.random.normal(ks[5], (Cmid,), dtype=jnp.float32)
    rv1 = jnp.abs(1.0 + 0.1 * jax.random.normal(ks[6], (Cmid,), dtype=jnp.float32))
    g2 = 1.0 + 0.1 * jax.random.normal(ks[7], (Cout,), dtype=jnp.float32)
    beta2 = jnp.linspace(-0.1, 0.1, Cout, dtype=jnp.float32)
    rm2 = jnp.linspace(-0.05, 0.05, Cout, dtype=jnp.float32)
    rv2 = jnp.linspace(0.9, 1.1, Cout, dtype=jnp.float32)

    params = (w1, g1, beta1, rm1, rv1, w2, g2, beta2, rm2, rv2)

    out = down_block(x, params)
    out = jax.block_until_ready(out)

    ref = _reference(x, params)
    assert out.shape == (N, Cout, H // 2, W // 2)
    assert jnp.allclose(out, ref, atol=1e-4, rtol=1e-4), "mismatch vs reference"

    print("KERNEL_OK")
</pallas_src>

<mosaic_0001>
module attributes {stable_mosaic.version = 11 : i64} {
  func.func @kernel(%arg0: i32, %arg1: memref<1x4x102xf32, #tpu.memory_space<vmem>>, %arg2: memref<3x3x8x4xf32, #tpu.memory_space<vmem>>, %arg3: memref<8x1xf32, #tpu.memory_space<vmem>>, %arg4: memref<3x3x8x8xf32, #tpu.memory_space<vmem>>, %arg5: memref<8x1xf32, #tpu.memory_space<vmem>>, %arg6: memref<1x80xf32, #tpu.memory_space<vmem>>, %arg7: memref<1x8x64xf32, #tpu.memory_space<vmem>>, %arg8: memref<8x102xf32, #tpu.memory_space<vmem>>) attributes {dimension_semantics = [#tpu.dimension_semantics<parallel>], iteration_bounds = array<i64: 2>, scalar_prefetch = 0 : i64, scratch_operands = 1 : i64, tpu.core_type = #tpu.core_type<tc>, window_params = [{transform_indices = @transform_0, window_bounds = array<i64: 1, 4, 102>}, {pipeline_mode = #tpu.pipeline_mode<synchronous>, transform_indices = @transform_1, window_bounds = array<i64: 3, 3, 8, 4>}, {pipeline_mode = #tpu.pipeline_mode<synchronous>, transform_indices = @transform_2, window_bounds = array<i64: 8, 1>}, {pipeline_mode = #tpu.pipeline_mode<synchronous>, transform_indices = @transform_3, window_bounds = array<i64: 3, 3, 8, 8>}, {pipeline_mode = #tpu.pipeline_mode<synchronous>, transform_indices = @transform_4, window_bounds = array<i64: 8, 1>}, {pipeline_mode = #tpu.pipeline_mode<synchronous>, transform_indices = @transform_5, window_bounds = array<i64: 1, 80>}, {transform_indices = @transform_6, window_bounds = array<i64: 1, 8, 64>}]} {
    %cst = arith.constant 0.000000e+00 : f32
    %0 = vector.broadcast %cst : f32 to vector<8x80xf32>
    %c0 = arith.constant 0 : index
    %c0_0 = arith.constant 0 : index
    %c0_1 = arith.constant 0 : index
    %c0_2 = arith.constant 0 : index
    %1 = vector.load %arg2[%c0, %c0_0, %c0_1, %c0_2] : memref<3x3x8x4xf32, #tpu.memory_space<vmem>>, vector<1x1x8x4xf32>
    %2 = vector.shape_cast %1 : vector<1x1x8x4xf32> to vector<8x4xf32>
    %c0_3 = arith.constant 0 : index
    %c0_4 = arith.constant 0 : index
    %c0_5 = arith.constant 0 : index
    %3 = vector.load %arg1[%c0_3, %c0_4, %c0_5] : memref<1x4x102xf32, #tpu.memory_space<vmem>>, vector<1x4x80xf32>
    %4 = vector.shape_cast %3 : vector<1x4x80xf32> to vector<4x80xf32>
    %cst_6 = arith.constant dense<0.000000e+00> : vector<8x80xf32>
    %5 = tpu.matmul %2, %4, %cst_6 {dimension_numbers = #tpu.dot_dimension_numbers<[1], [0], [0], [1], [0, 0, 1, 1], [], []>} : vector<8x4xf32>, vector<4x80xf32>, vector<8x80xf32> -> vector<8x80xf32>
    %6 = arith.addf %0, %5 : vector<8x80xf32>
    %c0_7 = arith.constant 0 : index
    %c1 = arith.constant 1 : index
    %c0_8 = arith.constant 0 : index
    %c0_9 = arith.constant 0 : index
    %7 = vector.load %arg2[%c0_7, %c1, %c0_8, %c0_9] : memref<3x3x8x4xf32, #tpu.memory_space<vmem>>, vector<1x1x8x4xf32>
    %8 = vector.shape_cast %7 : vector<1x1x8x4xf32> to vector<8x4xf32>
    %c0_10 = arith.constant 0 : index
    %c0_11 = arith.constant 0 : index
    %c1_12 = arith.constant 1 : index
    %9 = vector.load %arg1[%c0_10, %c0_11, %c1_12] : memref<1x4x102xf32, #tpu.memory_space<vmem>>, vector<1x4x80xf32>
    %10 = vector.shape_cast %9 : vector<1x4x80xf32> to vector<4x80xf32>
    %cst_13 = arith.constant dense<0.000000e+00> : vector<8x80xf32>
    %11 = tpu.matmul %8, %10, %cst_13 {dimension_numbers = #tpu.dot_dimension_numbers<[1], [0], [0], [1], [0, 0, 1, 1], [], []>} : vector<8x4xf32>, vector<4x80xf32>, vector<8x80xf32> -> vector<8x80xf32>
    %12 = arith.addf %6, %11 : vector<8x80xf32>
    %c0_14 = arith.constant 0 : index
    %c2 = arith.constant 2 : index
    %c0_15 = arith.constant 0 : index
    %c0_16 = arith.constant 0 : index
    %13 = vector.load %arg2[%c0_14, %c2, %c0_15, %c0_16] : memref<3x3x8x4xf32, #tpu.memory_space<vmem>>, vector<1x1x8x4xf32>
    %14 = vector.shape_cast %13 : vector<1x1x8x4xf32> to vector<8x4xf32>
    %c0_17 = arith.constant 0 : index
    %c0_18 = arith.constant 0 : index
    %c2_19 = arith.constant 2 : index
    %15 = vector.load %arg1[%c0_17, %c0_18, %c2_19] : memref<1x4x102xf32, #tpu.memory_space<vmem>>, vector<1x4x80xf32>
    %16 = vector.shape_cast %15 : vector<1x4x80xf32> to vector<4x80xf32>
    %cst_20 = arith.constant dense<0.000000e+00> : vector<8x80xf32>
    %17 = tpu.matmul %14, %16, %cst_20 {dimension_numbers = #tpu.dot_dimension_numbers<[1], [0], [0], [1], [0, 0, 1, 1], [], []>} : vector<8x4xf32>, vector<4x80xf32>, vector<8x80xf32> -> vector<8x80xf32>
    %18 = arith.addf %12, %17 : vector<8x80xf32>
    %c1_21 = arith.constant 1 : index
    %c0_22 = arith.constant 0 : index
    %c0_23 = arith.constant 0 : index
    %c0_24 = arith.constant 0 : index
    %19 = vector.load %arg2[%c1_21, %c0_22, %c0_23, %c0_24] : memref<3x3x8x4xf32, #tpu.memory_space<vmem>>, vector<1x1x8x4xf32>
    %20 = vector.shape_cast %19 : vector<1x1x8x4xf32> to vector<8x4xf32>
    %c0_25 = arith.constant 0 : index
    %c0_26 = arith.constant 0 : index
    %c10 = arith.constant 10 : index
    %21 = vector.load %arg1[%c0_25, %c0_26, %c10] : memref<1x4x102xf32, #tpu.memory_space<vmem>>, vector<1x4x80xf32>
    %22 = vector.shape_cast %21 : vector<1x4x80xf32> to vector<4x80xf32>
    %cst_27 = arith.constant dense<0.000000e+00> : vector<8x80xf32>
    %23 = tpu.matmul %20, %22, %cst_27 {dimension_numbers = #tpu.dot_dimension_numbers<[1], [0], [0], [1], [0, 0, 1, 1], [], []>} : vector<8x4xf32>, vector<4x80xf32>, vector<8x80xf32> -> vector<8x80xf32>
    %24 = arith.addf %18, %23 : vector<8x80xf32>
    %c1_28 = arith.constant 1 : index
    %c1_29 = arith.constant 1 : index
    %c0_30 = arith.constant 0 : index
    %c0_31 = arith.constant 0 : index
    %25 = vector.load %arg2[%c1_28, %c1_29, %c0_30, %c0_31] : memref<3x3x8x4xf32, #tpu.memory_space<vmem>>, vector<1x1x8x4xf32>
    %26 = vector.shape_cast %25 : vector<1x1x8x4xf32> to vector<8x4xf32>
    %c0_32 = arith.constant 0 : index
    %c0_33 = arith.constant 0 : index
    %c11 = arith.constant 11 : index
    %27 = vector.load %arg1[%c0_32, %c0_33, %c11] : memref<1x4x102xf32, #tpu.memory_space<vmem>>, vector<1x4x80xf32>
    %28 = vector.shape_cast %27 : vector<1x4x80xf32> to vector<4x80xf32>
    %cst_34 = arith.constant dense<0.000000e+00> : vector<8x80xf32>
    %29 = tpu.matmul %26, %28, %cst_34 {dimension_numbers = #tpu.dot_dimension_numbers<[1], [0], [0], [1], [0, 0, 1, 1], [], []>} : vector<8x4xf32>, vector<4x80xf32>, vector<8x80xf32> -> vector<8x80xf32>
    %30 = arith.addf %24, %29 : vector<8x80xf32>
    %c1_35 = arith.constant 1 : index
    %c2_36 = arith.constant 2 : index
    %c0_37 = arith.constant 0 : index
    %c0_38 = arith.constant 0 : index
    %31 = vector.load %arg2[%c1_35, %c2_36, %c0_37, %c0_38] : memref<3x3x8x4xf32, #tpu.memory_space<vmem>>, vector<1x1x8x4xf32>
    %32 = vector.shape_cast %31 : vector<1x1x8x4xf32> to vector<8x4xf32>
    %c0_39 = arith.constant 0 : index
    %c0_40 = arith.constant 0 : index
    %c12 = arith.constant 12 : index
    %33 = vector.load %arg1[%c0_39, %c0_40, %c12] : memref<1x4x102xf32, #tpu.memory_space<vmem>>, vector<1x4x80xf32>
    %34 = vector.shape_cast %33 : vector<1x4x80xf32> to vector<4x80xf32>
    %cst_41 = arith.constant dense<0.000000e+00> : vector<8x80xf32>
    %35 = tpu.matmul %32, %34, %cst_41 {dimension_numbers = #tpu.dot_dimension_numbers<[1], [0], [0], [1], [0, 0, 1, 1], [], []>} : vector<8x4xf32>, vector<4x80xf32>, vector<8x80xf32> -> vector<8x80xf32>
    %36 = arith.addf %30, %35 : vector<8x80xf32>
    %c2_42 = arith.constant 2 : index
    %c0_43 = arith.constant 0 : index
    %c0_44 = arith.constant 0 : index
    %c0_45 = arith.constant 0 : index
    %37 = vector.load %arg2[%c2_42, %c0_43, %c0_44, %c0_45] : memref<3x3x8x4xf32, #tpu.memory_space<vmem>>, vector<1x1x8x4xf32>
    %38 = vector.shape_cast %37 : vector<1x1x8x4xf32> to vector<8x4xf32>
    %c0_46 = arith.constant 0 : index
    %c0_47 = arith.constant 0 : index
    %c20 = arith.constant 20 : index
    %39 = vector.load %arg1[%c0_46, %c0_47, %c20] : memref<1x4x102xf32, #tpu.memory_space<vmem>>, vector<1x4x80xf32>
    %40 = vector.shape_cast %39 : vector<1x4x80xf32> to vector<4x80xf32>
    %cst_48 = arith.constant dense<0.000000e+00> : vector<8x80xf32>
    %41 = tpu.matmul %38, %40, %cst_48 {dimension_numbers = #tpu.dot_dimension_numbers<[1], [0], [0], [1], [0, 0, 1, 1], [], []>} : vector<8x4xf32>, vector<4x80xf32>, vector<8x80xf32> -> vector<8x80xf32>
    %42 = arith.addf %36, %41 : vector<8x80xf32>
    %c2_49 = arith.constant 2 : index
    %c1_50 = arith.constant 1 : index
    %c0_51 = arith.constant 0 : index
    %c0_52 = arith.constant 0 : index
    %43 = vector.load %arg2[%c2_49, %c1_50, %c0_51, %c0_52] : memref<3x3x8x4xf32, #tpu.memory_space<vmem>>, vector<1x1x8x4xf32>
    %44 = vector.shape_cast %43 : vector<1x1x8x4xf32> to vector<8x4xf32>
    %c0_53 = arith.constant 0 : index
    %c0_54 = arith.constant 0 : index
    %c21 = arith.constant 21 : index
    %45 = vector.load %arg1[%c0_53, %c0_54, %c21] : memref<1x4x102xf32, #tpu.memory_space<vmem>>, vector<1x4x80xf32>
    %46 = vector.shape_cast %45 : vector<1x4x80xf32> to vector<4x80xf32>
    %cst_55 = arith.constant dense<0.000000e+00> : vector<8x80xf32>
    %47 = tpu.matmul %44, %46, %cst_55 {dimension_numbers = #tpu.dot_dimension_numbers<[1], [0], [0], [1], [0, 0, 1, 1], [], []>} : vector<8x4xf32>, vector<4x80xf32>, vector<8x80xf32> -> vector<8x80xf32>
    %48 = arith.addf %42, %47 : vector<8x80xf32>
    %c2_56 = arith.constant 2 : index
    %c2_57 = arith.constant 2 : index
    %c0_58 = arith.constant 0 : index
    %c0_59 = arith.constant 0 : index
    %49 = vector.load %arg2[%c2_56, %c2_57, %c0_58, %c0_59] : memref<3x3x8x4xf32, #tpu.memory_space<vmem>>, vector<1x1x8x4xf32>
    %50 = vector.shape_cast %49 : vector<1x1x8x4xf32> to vector<8x4xf32>
    %c0_60 = arith.constant 0 : index
    %c0_61 = arith.constant 0 : index
    %c22 = arith.constant 22 : index
    %51 = vector.load %arg1[%c0_60, %c0_61, %c22] : memref<1x4x102xf32, #tpu.memory_space<vmem>>, vector<1x4x80xf32>
    %52 = vector.shape_cast %51 : vector<1x4x80xf32> to vector<4x80xf32>
    %cst_62 = arith.constant dense<0.000000e+00> : vector<8x80xf32>
    %53 = tpu.matmul %50, %52, %cst_62 {dimension_numbers = #tpu.dot_dimension_numbers<[1], [0], [0], [1], [0, 0, 1, 1], [], []>} : vector<8x4xf32>, vector<4x80xf32>, vector<8x80xf32> -> vector<8x80xf32>
    %54 = arith.addf %48, %53 : vector<8x80xf32>
    %c0_63 = arith.constant 0 : index
    %c0_64 = arith.constant 0 : index
    %55 = vector.load %arg3[%c0_63, %c0_64] : memref<8x1xf32, #tpu.memory_space<vmem>>, vector<8x1xf32>
    %56 = vector.broadcast %55 : vector<8x1xf32> to vector<8x80xf32>
    %57 = arith.addf %54, %56 : vector<8x80xf32>
    %cst_65 = arith.constant 0.00999999977 : f32
    %58 = vector.broadcast %cst_65 : f32 to vector<8x80xf32>
    %59 = arith.mulf %58, %57 : vector<8x80xf32>
    %60 = arith.maximumf %57, %59 : vector<8x80xf32>
    %c0_66 = arith.constant 0 : index
    %c0_67 = arith.constant 0 : index
    %61 = vector.load %arg6[%c0_66, %c0_67] : memref<1x80xf32, #tpu.memory_space<vmem>>, vector<1x80xf32>
    %62 = vector.broadcast %61 : vector<1x80xf32> to vector<8x80xf32>
    %63 = arith.mulf %60, %62 : vector<8x80xf32>
    %cst_68 = arith.constant 0.000000e+00 : f32
    %64 = vector.broadcast %cst_68 : f32 to vector<8x11xf32>
    %c0_69 = arith.constant 0 : index
    %c0_70 = arith.constant 0 : index
    %65 = vector.load %arg8[%c0_69, %c0_70] : memref<8x102xf32, #tpu.memory_space<vmem>>, vector<8x11xf32>
    tpu.vector_store %arg8[%c0_69, %c0_70], %64 {strides = array<i32>} : memref<8x102xf32, #tpu.memory_space<vmem>>, vector<8x11xf32>,
    %cst_71 = arith.constant 0.000000e+00 : f32
    %66 = vector.broadcast %cst_71 : f32 to vector<8x11xf32>
    %c0_72 = arith.constant 0 : index
    %c91 = arith.constant 91 : index
    %67 = vector.load %arg8[%c0_72, %c91] : memref<8x102xf32, #tpu.memory_space<vmem>>, vector<8x11xf32>
    tpu.vector_store %arg8[%c0_72, %c91], %66 {strides = array<i32>} : memref<8x102xf32, #tpu.memory_space<vmem>>, vector<8x11xf32>,
    %c0_73 = arith.constant 0 : index
    %c11_74 = arith.constant 11 : index
    %68 = vector.load %arg8[%c0_73, %c11_74] : memref<8x102xf32, #tpu.memory_space<vmem>>, vector<8x80xf32>
    tpu.vector_store %arg8[%c0_73, %c11_74], %63 {strides = array<i32>} : memref<8x102xf32, #tpu.memory_space<vmem>>, vector<8x80xf32>,
    %cst_75 = arith.constant 0.000000e+00 : f32
    %69 = vector.broadcast %cst_75 : f32 to vector<8x80xf32>
    %c0_76 = arith.constant 0 : index
    %c0_77 = arith.constant 0 : index
    %c0_78 = arith.constant 0 : index
    %c0_79 = arith.constant 0 : index
    %70 = vector.load %arg4[%c0_76, %c0_77, %c0_78, %c0_79] : memref<3x3x8x8xf32, #tpu.memory_space<vmem>>, vector<1x1x8x8xf32>
    %71 = vector.shape_cast %70 : vector<1x1x8x8xf32> to vector<8x8xf32>
    %c0_80 = arith.constant 0 : index
    %c0_81 = arith.constant 0 : index
    %72 = vector.load %arg8[%c0_80, %c0_81] : memref<8x102xf32, #tpu.memory_space<vmem>>, vector<8x80xf32>
    %cst_82 = arith.constant dense<0.000000e+00> : vector<8x80xf32>
    %73 = tpu.matmul %71, %72, %cst_82 {dimension_numbers = #tpu.dot_dimension_numbers<[1], [0], [0], [1], [0, 0, 1, 1], [], []>} : vector<8x8xf32>, vector<8x80xf32>, vector<8x80xf32> -> vector<8x80xf32>
    %74 = arith.addf %69, %73 : vector<8x80xf32>
    %c0_83 = arith.constant 0 : index
    %c1_84 = arith.constant 1 : index
    %c0_85 = arith.constant 0 : index
    %c0_86 = arith.constant 0 : index
    %75 = vector.load %arg4[%c0_83, %c1_84, %c0_85, %c0_86] : memref<3x3x8x8xf32, #tpu.memory_space<vmem>>, vector<1x1x8x8xf32>
    %76 = vector.shape_cast %75 : vector<1x1x8x8xf32> to vector<8x8xf32>
    %c0_87 = arith.constant 0 : index
    %c1_88 = arith.constant 1 : index
    %77 = vector.load %arg8[%c0_87, %c1_88] : memref<8x102xf32, #tpu.memory_space<vmem>>, vector<8x80xf32>
    %cst_89 = arith.constant dense<0.000000e+00> : vector<8x80xf32>
    %78 = tpu.matmul %76, %77, %cst_89 {dimension_numbers = #tpu.dot_dimension_numbers<[1], [0], [0], [1], [0, 0, 1, 1], [], []>} : vector<8x8xf32>, vector<8x80xf32>, vector<8x80xf32> -> vector<8x80xf32>
    %79 = arith.addf %74, %78 : vector<8x80xf32>
    %c0_90 = arith.constant 0 : index
    %c2_91 = arith.constant 2 : index
    %c0_92 = arith.constant 0 : index
    %c0_93 = arith.constant 0 : index
    %80 = vector.load %arg4[%c0_90, %c2_91, %c0_92, %c0_93] : memref<3x3x8x8xf32, #tpu.memory_space<vmem>>, vector<1x1x8x8xf32>
    %81 = vector.shape_cast %80 : vector<1x1x8x8xf32> to vector<8x8xf32>
    %c0_94 = arith.constant 0 : index
    %c2_95 = arith.constant 2 : index
    %82 = vector.load %arg8[%c0_94, %c2_95] : memref<8x102xf32, #tpu.memory_space<vmem>>, vector<8x80xf32>
    %cst_96 = arith.constant dense<0.000000e+00> : vector<8x80xf32>
    %83 = tpu.matmul %81, %82, %cst_96 {dimension_numbers = #tpu.dot_dimension_numbers<[1], [0], [0], [1], [0, 0, 1, 1], [], []>} : vector<8x8xf32>, vector<8x80xf32>, vector<8x80xf32> -> vector<8x80xf32>
    %84 = arith.addf %79, %83 : vector<8x80xf32>
    %c1_97 = arith.constant 1 : index
    %c0_98 = arith.constant 0 : index
    %c0_99 = arith.constant 0 : index
    %c0_100 = arith.constant 0 : index
    %85 = vector.load %arg4[%c1_97, %c0_98, %c0_99, %c0_100] : memref<3x3x8x8xf32, #tpu.memory_space<vmem>>, vector<1x1x8x8xf32>
    %86 = vector.shape_cast %85 : vector<1x1x8x8xf32> to vector<8x8xf32>
    %c0_101 = arith.constant 0 : index
    %c10_102 = arith.constant 10 : index
    %87 = vector.load %arg8[%c0_101, %c10_102] : memref<8x102xf32, #tpu.memory_space<vmem>>, vector<8x80xf32>
    %cst_103 = arith.constant dense<0.000000e+00> : vector<8x80xf32>
    %88 = tpu.matmul %86, %87, %cst_103 {dimension_numbers = #tpu.dot_dimension_numbers<[1], [0], [0], [1], [0, 0, 1, 1], [], []>} : vector<8x8xf32>, vector<8x80xf32>, vector<8x80xf32> -> vector<8x80xf32>
    %89 = arith.addf %84, %88 : vector<8x80xf32>
    %c1_104 = arith.constant 1 : index
    %c1_105 = arith.constant 1 : index
    %c0_106 = arith.constant 0 : index
    %c0_107 = arith.constant 0 : index
    %90 = vector.load %arg4[%c1_104, %c1_105, %c0_106, %c0_107] : memref<3x3x8x8xf32, #tpu.memory_space<vmem>>, vector<1x1x8x8xf32>
    %91 = vector.shape_cast %90 : vector<1x1x8x8xf32> to vector<8x8xf32>
    %c0_108 = arith.constant 0 : index
    %c11_109 = arith.constant 11 : index
    %92 = vector.load %arg8[%c0_108, %c11_109] : memref<8x102xf32, #tpu.memory_space<vmem>>, vector<8x80xf32>
    %cst_110 = arith.constant dense<0.000000e+00> : vector<8x80xf32>
    %93 = tpu.matmul %91, %92, %cst_110 {dimension_numbers = #tpu.dot_dimension_numbers<[1], [0], [0], [1], [0, 0, 1, 1], [], []>} : vector<8x8xf32>, vector<8x80xf32>, vector<8x80xf32> -> vector<8x80xf32>
    %94 = arith.addf %89, %93 : vector<8x80xf32>
    %c1_111 = arith.constant 1 : index
    %c2_112 = arith.constant 2 : index
    %c0_113 = arith.constant 0 : index
    %c0_114 = arith.constant 0 : index
    %95 = vector.load %arg4[%c1_111, %c2_112, %c0_113, %c0_114] : memref<3x3x8x8xf32, #tpu.memory_space<vmem>>, vector<1x1x8x8xf32>
    %96 = vector.shape_cast %95 : vector<1x1x8x8xf32> to vector<8x8xf32>
    %c0_115 = arith.constant 0 : index
    %c12_116 = arith.constant 12 : index
    %97 = vector.load %arg8[%c0_115, %c12_116] : memref<8x102xf32, #tpu.memory_space<vmem>>, vector<8x80xf32>
    %cst_117 = arith.constant dense<0.000000e+00> : vector<8x80xf32>
    %98 = tpu.matmul %96, %97, %cst_117 {dimension_numbers = #tpu.dot_dimension_numbers<[1], [0], [0], [1], [0, 0, 1, 1], [], []>} : vector<8x8xf32>, vector<8x80xf32>, vector<8x80xf32> -> vector<8x80xf32>
    %99 = arith.addf %94, %98 : vector<8x80xf32>
    %c2_118 = arith.constant 2 : index
    %c0_119 = arith.constant 0 : index
    %c0_120 = arith.constant 0 : index
    %c0_121 = arith.constant 0 : index
    %100 = vector.load %arg4[%c2_118, %c0_119, %c0_120, %c0_121] : memref<3x3x8x8xf32, #tpu.memory_space<vmem>>, vector<1x1x8x8xf32>
    %101 = vector.shape_cast %100 : vector<1x1x8x8xf32> to vector<8x8xf32>
    %c0_122 = arith.constant 0 : index
    %c20_123 = arith.constant 20 : index
    %102 = vector.load %arg8[%c0_122, %c20_123] : memref<8x102xf32, #tpu.memory_space<vmem>>, vector<8x80xf32>
    %cst_124 = arith.constant dense<0.000000e+00> : vector<8x80xf32>
    %103 = tpu.matmul %101, %102, %cst_124 {dimension_numbers = #tpu.dot_dimension_numbers<[1], [0], [0], [1], [0, 0, 1, 1], [], []>} : vector<8x8xf32>, vector<8x80xf32>, vector<8x80xf32> -> vector<8x80xf32>
    %104 = arith.addf %99, %103 : vector<8x80xf32>
    %c2_125 = arith.constant 2 : index
    %c1_126 = arith.constant 1 : index
    %c0_127 = arith.constant 0 : index
    %c0_128 = arith.constant 0 : index
    %105 = vector.load %arg4[%c2_125, %c1_126, %c0_127, %c0_128] : memref<3x3x8x8xf32, #tpu.memory_space<vmem>>, vector<1x1x8x8xf32>
    %106 = vector.shape_cast %105 : vector<1x1x8x8xf32> to vector<8x8xf32>
    %c0_129 = arith.constant 0 : index
    %c21_130 = arith.constant 21 : index
    %107 = vector.load %arg8[%c0_129, %c21_130] : memref<8x102xf32, #tpu.memory_space<vmem>>, vector<8x80xf32>
    %cst_131 = arith.constant dense<0.000000e+00> : vector<8x80xf32>
    %108 = tpu.matmul %106, %107, %cst_131 {dimension_numbers = #tpu.dot_dimension_numbers<[1], [0], [0], [1], [0, 0, 1, 1], [], []>} : vector<8x8xf32>, vector<8x80xf32>, vector<8x80xf32> -> vector<8x80xf32>
    %109 = arith.addf %104, %108 : vector<8x80xf32>
    %c2_132 = arith.constant 2 : index
    %c2_133 = arith.constant 2 : index
    %c0_134 = arith.constant 0 : index
    %c0_135 = arith.constant 0 : index
    %110 = vector.load %arg4[%c2_132, %c2_133, %c0_134, %c0_135] : memref<3x3x8x8xf32, #tpu.memory_space<vmem>>, vector<1x1x8x8xf32>
    %111 = vector.shape_cast %110 : vector<1x1x8x8xf32> to vector<8x8xf32>
    %c0_136 = arith.constant 0 : index
    %c22_137 = arith.constant 22 : index
    %112 = vector.load %arg8[%c0_136, %c22_137] : memref<8x102xf32, #tpu.memory_space<vmem>>, vector<8x80xf32>
    %cst_138 = arith.constant dense<0.000000e+00> : vector<8x80xf32>
    %113 = tpu.matmul %111, %112, %cst_138 {dimension_numbers = #tpu.dot_dimension_numbers<[1], [0], [0], [1], [0, 0, 1, 1], [], []>} : vector<8x8xf32>, vector<8x80xf32>, vector<8x80xf32> -> vector<8x80xf32>
    %114 = arith.addf %109, %113 : vector<8x80xf32>
    %c0_139 = arith.constant 0 : index
    %c0_140 = arith.constant 0 : index
    %115 = vector.load %arg5[%c0_139, %c0_140] : memref<8x1xf32, #tpu.memory_space<vmem>>, vector<8x1xf32>
    %116 = vector.broadcast %115 : vector<8x1xf32> to vector<8x80xf32>
    %117 = arith.addf %114, %116 : vector<8x80xf32>
    %cst_141 = arith.constant 0.00999999977 : f32
    %118 = vector.broadcast %cst_141 : f32 to vector<8x80xf32>
    %119 = arith.mulf %118, %117 : vector<8x80xf32>
    %120 = arith.maximumf %117, %119 : vector<8x80xf32>
    %121 = vector.extract_strided_slice %120 {offsets = [0, 0], sizes = [8, 8], strides = [1, 1]} : vector<8x80xf32> to vector<8x8xf32>
    %c0_142 = arith.constant 0 : index
    %c0_143 = arith.constant 0 : index
    %c0_144 = arith.constant 0 : index
    %122 = vector.load %arg7[%c0_142, %c0_143, %c0_144] : memref<1x8x64xf32, #tpu.memory_space<vmem>>, vector<1x8x8xf32>
    %123 = vector.shape_cast %122 : vector<1x8x8xf32> to vector<8x8xf32>
    %124 = vector.shape_cast %121 : vector<8x8xf32> to vector<1x8x8xf32>
    tpu.vector_store %arg7[%c0_142, %c0_143, %c0_144], %124 {strides = array<i32>} : memref<1x8x64xf32, #tpu.memory_space<vmem>>, vector<1x8x8xf32>,
    %125 = vector.extract_strided_slice %120 {offsets = [0, 10], sizes = [8, 8], strides = [1, 1]} : vector<8x80xf32> to vector<8x8xf32>
    %c0_145 = arith.constant 0 : index
    %c0_146 = arith.constant 0 : index
    %c8 = arith.constant 8 : index
    %126 = vector.load %arg7[%c0_145, %c0_146, %c8] : memref<1x8x64xf32, #tpu.memory_space<vmem>>, vector<1x8x8xf32>
    %127 = vector.shape_cast %126 : vector<1x8x8xf32> to vector<8x8xf32>
    %128 = vector.shape_cast %125 : vector<8x8xf32> to vector<1x8x8xf32>
    tpu.vector_store %arg7[%c0_145, %c0_146, %c8], %128 {strides = array<i32>} : memref<1x8x64xf32, #tpu.memory_space<vmem>>, vector<1x8x8xf32>,
    %129 = vector.extract_strided_slice %120 {offsets = [0, 20], sizes = [8, 8], strides = [1, 1]} : vector<8x80xf32> to vector<8x8xf32>
    %c0_147 = arith.constant 0 : index
    %c0_148 = arith.constant 0 : index
    %c16 = arith.constant 16 : index
    %130 = vector.load %arg7[%c0_147, %c0_148, %c16] : memref<1x8x64xf32, #tpu.memory_space<vmem>>, vector<1x8x8xf32>
    %131 = vector.shape_cast %130 : vector<1x8x8xf32> to vector<8x8xf32>
    %132 = vector.shape_cast %129 : vector<8x8xf32> to vector<1x8x8xf32>
    tpu.vector_store %arg7[%c0_147, %c0_148, %c16], %132 {strides = array<i32>} : memref<1x8x64xf32, #tpu.memory_space<vmem>>, vector<1x8x8xf32>,
    %133 = vector.extract_strided_slice %120 {offsets = [0, 30], sizes = [8, 8], strides = [1, 1]} : vector<8x80xf32> to vector<8x8xf32>
    %c0_149 = arith.constant 0 : index
    %c0_150 = arith.constant 0 : index
    %c24 = arith.constant 24 : index
    %134 = vector.load %arg7[%c0_149, %c0_150, %c24] : memref<1x8x64xf32, #tpu.memory_space<vmem>>, vector<1x8x8xf32>
    %135 = vector.shape_cast %134 : vector<1x8x8xf32> to vector<8x8xf32>
    %136 = vector.shape_cast %133 : vector<8x8xf32> to vector<1x8x8xf32>
    tpu.vector_store %arg7[%c0_149, %c0_150, %c24], %136 {strides = array<i32>} : memref<1x8x64xf32, #tpu.memory_space<vmem>>, vector<1x8x8xf32>,
    %137 = vector.extract_strided_slice %120 {offsets = [0, 40], sizes = [8, 8], strides = [1, 1]} : vector<8x80xf32> to vector<8x8xf32>
    %c0_151 = arith.constant 0 : index
    %c0_152 = arith.constant 0 : index
    %c32 = arith.constant 32 : index
    %138 = vector.load %arg7[%c0_151, %c0_152, %c32] : memref<1x8x64xf32, #tpu.memory_space<vmem>>, vector<1x8x8xf32>
    %139 = vector.shape_cast %138 : vector<1x8x8xf32> to vector<8x8xf32>
    %140 = vector.shape_cast %137 : vector<8x8xf32> to vector<1x8x8xf32>
    tpu.vector_store %arg7[%c0_151, %c0_152, %c32], %140 {strides = array<i32>} : memref<1x8x64xf32, #tpu.memory_space<vmem>>, vector<1x8x8xf32>,
    %141 = vector.extract_strided_slice %120 {offsets = [0, 50], sizes = [8, 8], strides = [1, 1]} : vector<8x80xf32> to vector<8x8xf32>
    %c0_153 = arith.constant 0 : index
    %c0_154 = arith.constant 0 : index
    %c40 = arith.constant 40 : index
    %142 = vector.load %arg7[%c0_153, %c0_154, %c40] : memref<1x8x64xf32, #tpu.memory_space<vmem>>, vector<1x8x8xf32>
    %143 = vector.shape_cast %142 : vector<1x8x8xf32> to vector<8x8xf32>
    %144 = vector.shape_cast %141 : vector<8x8xf32> to vector<1x8x8xf32>
    tpu.vector_store %arg7[%c0_153, %c0_154, %c40], %144 {strides = array<i32>} : memref<1x8x64xf32, #tpu.memory_space<vmem>>, vector<1x8x8xf32>,
    %145 = vector.extract_strided_slice %120 {offsets = [0, 60], sizes = [8, 8], strides = [1, 1]} : vector<8x80xf32> to vector<8x8xf32>
    %c0_155 = arith.constant 0 : index
    %c0_156 = arith.constant 0 : index
    %c48 = arith.constant 48 : index
    %146 = vector.load %arg7[%c0_155, %c0_156, %c48] : memref<1x8x64xf32, #tpu.memory_space<vmem>>, vector<1x8x8xf32>
    %147 = vector.shape_cast %146 : vector<1x8x8xf32> to vector<8x8xf32>
    %148 = vector.shape_cast %145 : vector<8x8xf32> to vector<1x8x8xf32>
    tpu.vector_store %arg7[%c0_155, %c0_156, %c48], %148 {strides = array<i32>} : memref<1x8x64xf32, #tpu.memory_space<vmem>>, vector<1x8x8xf32>,
    %149 = vector.extract_strided_slice %120 {offsets = [0, 70], sizes = [8, 8], strides = [1, 1]} : vector<8x80xf32> to vector<8x8xf32>
    %c0_157 = arith.constant 0 : index
    %c0_158 = arith.constant 0 : index
    %c56 = arith.constant 56 : index
    %150 = vector.load %arg7[%c0_157, %c0_158, %c56] : memref<1x8x64xf32, #tpu.memory_space<vmem>>, vector<1x8x8xf32>
    %151 = vector.shape_cast %150 : vector<1x8x8xf32> to vector<8x8xf32>
    %152 = vector.shape_cast %149 : vector<8x8xf32> to vector<1x8x8xf32>
    tpu.vector_store %arg7[%c0_157, %c0_158, %c56], %152 {strides = array<i32>} : memref<1x8x64xf32, #tpu.memory_space<vmem>>, vector<1x8x8xf32>,
    return
  }
  func.func @transform_0(%arg0: i32) -> (i32, i32, i32) {
    %c0_i32 = arith.constant 0 : i32
    %c0_i32_0 = arith.constant 0 : i32
    %c0_i32_1 = arith.constant 0 : i32
    return %arg0, %c0_i32, %c0_i32_0 : i32, i32, i32
  }
  func.func @transform_1(%arg0: i32) -> (i32, i32, i32, i32) {
    %c0_i32 = arith.constant 0 : i32
    %c0_i32_0 = arith.constant 0 : i32
    %c0_i32_1 = arith.constant 0 : i32
    %c0_i32_2 = arith.constant 0 : i32
    %c0_i32_3 = arith.constant 0 : i32
    return %c0_i32, %c0_i32_0, %c0_i32_1, %c0_i32_2 : i32, i32, i32, i32
  }
  func.func @transform_2(%arg0: i32) -> (i32, i32) {
    %c0_i32 = arith.constant 0 : i32
    %c0_i32_0 = arith.constant 0 : i32
    %c0_i32_1 = arith.constant 0 : i32
    return %c0_i32, %c0_i32_0 : i32, i32
  }
  func.func @transform_3(%arg0: i32) -> (i32, i32, i32, i32) {
    %c0_i32 = arith.constant 0 : i32
    %c0_i32_0 = arith.constant 0 : i32
    %c0_i32_1 = arith.constant 0 : i32
    %c0_i32_2 = arith.constant 0 : i32
    %c0_i32_3 = arith.constant 0 : i32
    return %c0_i32, %c0_i32_0, %c0_i32_1, %c0_i32_2 : i32, i32, i32, i32
  }
  func.func @transform_4(%arg0: i32) -> (i32, i32) {
    %c0_i32 = arith.constant 0 : i32
    %c0_i32_0 = arith.constant 0 : i32
    %c0_i32_1 = arith.constant 0 : i32
    return %c0_i32, %c0_i32_0 : i32, i32
  }
  func.func @transform_5(%arg0: i32) -> (i32, i32) {
    %c0_i32 = arith.constant 0 : i32
    %c0_i32_0 = arith.constant 0 : i32
    %c0_i32_1 = arith.constant 0 : i32
    return %c0_i32, %c0_i32_0 : i32, i32
  }
  func.func @transform_6(%arg0: i32) -> (i32, i32, i32) {
    %c0_i32 = arith.constant 0 : i32
    %c0_i32_0 = arith.constant 0 : i32
    %c0_i32_1 = arith.constant 0 : i32
    return %arg0, %c0_i32, %c0_i32_0 : i32, i32, i32
  }
}

</mosaic_0001>

<llo_original>
// kernel: tpu_custom_call.1
$region0: #{tpu_custom_call.1}
  #allocation0 [shape = 'u32[]', space=smem, size = 0x4, offset = 0x4, fixed_abs, tag = 'smem constant byte address 0x4 - core index']
  #allocation1 [shape = 'u32[144,128]{1,0:T(1,128)}', space=vmem, size = 0x12000, scoped, tag = 'internal scratch']
  #allocation2 [shape = 'f32[8,102]{1,0:T(8,128)}', space=vmem, size = 0x1000, scoped, tag = 'scratch operand']
  %s0 = inlined_call_operand.vmem [shape: f32[2,4,102], index: 0, kind: input, shape index: {}]
  %s1 = inlined_call_operand.vmem [shape: f32[3,3,8,4], index: 1, kind: input, shape index: {}]
  %s2 = inlined_call_operand.vmem [shape: f32[8,1], index: 2, kind: input, shape index: {}]
  %s3 = inlined_call_operand.vmem [shape: f32[3,3,8,8], index: 3, kind: input, shape index: {}]
  %s4 = inlined_call_operand.vmem [shape: f32[8,1], index: 4, kind: input, shape index: {}]
  %s5 = inlined_call_operand.vmem [shape: f32[1,80], index: 5, kind: input, shape index: {}]
  %s6 = inlined_call_operand.hbm [shape: f32[2,8,64], index: 6, kind: output, shape index: {}]
  %s7 = sld [smem:[#allocation0]]
  $region57: #{tpu_custom_call.1} parent=0
    _
  %s9 = ssub.s32 1, %s7
  %s10 = scalar_select 0, %s9, %s7
  $region1: #{tpu_custom_call.1} parent=0
    #allocation3 [shape = 'u8[8192]{0}', space=vmem, size = 0x2000, scoped, tag = 'output window, operand 0']
    #allocation4 [shape = 's32[2]{0}', space=sflag, size = 0x8, scoped, tag = 'scoped memory for tpu_custom_call.1']
    %11 = vsyncpa [#allocation4], 0
    %s12 = scalar_lea.sflag [#allocation4], 1
    %13 = vsyncpa %s12, 0
    loop: start=0, step=1, limit=4
    $region2: #{tpu_custom_call.1} parent=1 // loop_pre_header
      _
    $region3: #{tpu_custom_call.1} parent=1 // loop_header
      %s15 = sphi 0, %s19
      %p16 = scmp.ge.s32.totalorder %s15, 4
      %s25 = sphi 0, %s27
      %s28 = sphi 0, %s25
      %s29 = sphi 0, %s28
      %s45 = sphi 0, %s29
      %s49 = sphi 0, %s49
      %s51 = sphi 0, %s49
      %s52 = sphi 0, %s51
      %s66 = sphi 0, %s52
      %s70 = sphi 0, %s70
      %s72 = sphi 0, %s70
      %s73 = sphi 0, %s72
      %s87 = sphi 0, %s73
      %s91 = sphi 0, %s91
      %s93 = sphi 0, %s91
      %s94 = sphi 0, %s93
      %s108 = sphi 0, %s94
      %s112 = sphi 0, %s112
      %s114 = sphi 0, %s112
      %s115 = sphi 0, %s114
      %s129 = sphi 0, %s115
      %s133 = sphi 0, %s133
      %s135 = sphi 0, %s133
      %s136 = sphi 0, %s135
      %s150 = sphi 0, %s136
      %s156 = sphi 0, %s158
      %s159 = sphi 0, %s156
      %s160 = sphi 0, %s159
      %s176 = sphi 0, %s160
    $region4: #{tpu_custom_call.1} parent=1 // loop_header_branch
      %18 = sbr.rel (%p16) target = $region8
    $region5: #{tpu_custom_call.1} parent=1 // loop_body
      %s20 = ssub.s32 %s15, 1
      %s21 = ssub.s32 %s15, 2
      %s22 = sadd.s32 %s15, 1
      %s23 = ssub.s32 %s15, %s22
      %p24 = scmp.eq.s32.totalorder %s23, 0
      %s26 = sadd.s32 %s25, 1
      %s27 = scalar_select %p24, %s25, %s26
      %p30 = pneg %p24
      %p31 = scmp.eq.s32.totalorder %s15, 1
      %p32 = por %p30, %p31
      %p33 = scmp.ne.s32.totalorder %s25, %s28
      %p34 = scmp.eq.s32.totalorder %s15, 0
      %p35 = por %p33, %p34
      %p36 = scmp.ne.s32.totalorder %s25, %s28
      %p37 = scmp.eq.s32.totalorder %s20, 1
      %p38 = por %p36, %p37
      %p39 = scmp.ne.s32.totalorder %s28, %s29
      %p40 = scmp.eq.s32.totalorder %s20, 0
      %p41 = por %p39, %p40
      %p42 = scmp.ne.s32.totalorder %s28, %s29
      %p43 = scmp.eq.s32.totalorder %s21, 1
      %p44 = por %p42, %p43
      %p46 = scmp.ne.s32.totalorder %s29, %s45
      %p47 = scmp.eq.s32.totalorder %s21, 0
      %p48 = por %p46, %p47
      %s50 = sadd.s32 %s49, 1
      %p53 = scmp.eq.s32.totalorder %s15, 1
      %p54 = scmp.ne.s32.totalorder %s49, %s51
      %p55 = scmp.eq.s32.totalorder %s15, 0
      %p56 = por %p54, %p55
      %p57 = scmp.ne.s32.totalorder %s49, %s51
      %p58 = scmp.eq.s32.totalorder %s20, 1
      %p59 = por %p57, %p58
      %p60 = scmp.ne.s32.totalorder %s51, %s52
      %p61 = scmp.eq.s32.totalorder %s20, 0
      %p62 = por %p60, %p61
      %p63 = scmp.ne.s32.totalorder %s51, %s52
      %p64 = scmp.eq.s32.totalorder %s21, 1
      %p65 = por %p63, %p64
      %p67 = scmp.ne.s32.totalorder %s52, %s66
      %p68 = scmp.eq.s32.totalorder %s21, 0
      %p69 = por %p67, %p68
      %s71 = sadd.s32 %s70, 1
      %p74 = scmp.eq.s32.totalorder %s15, 1
      %p75 = scmp.ne.s32.totalorder %s70, %s72
      %p76 = scmp.eq.s32.totalorder %s15, 0
      %p77 = por %p75, %p76
      %p78 = scmp.ne.s32.totalorder %s70, %s72
      %p79 = scmp.eq.s32.totalorder %s20, 1
      %p80 = por %p78, %p79
      %p81 = scmp.ne.s32.totalorder %s72, %s73
      %p82 = scmp.eq.s32.totalorder %s20, 0
      %p83 = por %p81, %p82
      %p84 = scmp.ne.s32.totalorder %s72, %s73
      %p85 = scmp.eq.s32.totalorder %s21, 1
      %p86 = por %p84, %p85
      %p88 = scmp.ne.s32.totalorder %s73, %s87
      %p89 = scmp.eq.s32.totalorder %s21, 0
      %p90 = por %p88, %p89
      %s92 = sadd.s32 %s91, 1
      %p95 = scmp.eq.s32.totalorder %s15, 1
      %p96 = scmp.ne.s32.totalorder %s91, %s93
      %p97 = scmp.eq.s32.totalorder %s15, 0
      %p98 = por %p96, %p97
      %p99 = scmp.ne.s32.totalorder %s91, %s93
      %p100 = scmp.eq.s32.totalorder %s20, 1
      %p101 = por %p99, %p100
      %p102 = scmp.ne.s32.totalorder %s93, %s94
      %p103 = scmp.eq.s32.totalorder %s20, 0
      %p104 = por %p102, %p103
      %p105 = scmp.ne.s32.totalorder %s93, %s94
      %p106 = scmp.eq.s32.totalorder %s21, 1
      %p107 = por %p105, %p106
      %p109 = scmp.ne.s32.totalorder %s94, %s108
      %p110 = scmp.eq.s32.totalorder %s21, 0
      %p111 = por %p109, %p110
      %s113 = sadd.s32 %s112, 1
      %p116 = scmp.eq.s32.totalorder %s15, 1
      %p117 = scmp.ne.s32.totalorder %s112, %s114
      %p118 = scmp.eq.s32.totalorder %s15, 0
      %p119 = por %p117, %p118
      %p120 = scmp.ne.s32.totalorder %s112, %s114
      %p121 = scmp.eq.s32.totalorder %s20, 1
      %p122 = por %p120, %p121
      %p123 = scmp.ne.s32.totalorder %s114, %s115
      %p124 = scmp.eq.s32.totalorder %s20, 0
      %p125 = por %p123, %p124
      %p126 = scmp.ne.s32.totalorder %s114, %s115
      %p127 = scmp.eq.s32.totalorder %s21, 1
      %p128 = por %p126, %p127
      %p130 = scmp.ne.s32.totalorder %s115, %s129
      %p131 = scmp.eq.s32.totalorder %s21, 0
      %p132 = por %p130, %p131
      %s134 = sadd.s32 %s133, 1
      %p137 = scmp.eq.s32.totalorder %s15, 1
      %p138 = scmp.ne.s32.totalorder %s133, %s135
      %p139 = scmp.eq.s32.totalorder %s15, 0
      %p140 = por %p138, %p139
      %p141 = scmp.ne.s32.totalorder %s133, %s135
      %p142 = scmp.eq.s32.totalorder %s20, 1
      %p143 = por %p141, %p142
      %p144 = scmp.ne.s32.totalorder %s135, %s136
      %p145 = scmp.eq.s32.totalorder %s20, 0
      %p146 = por %p144, %p145
      %p147 = scmp.ne.s32.totalorder %s135, %s136
      %p148 = scmp.eq.s32.totalorder %s21, 1
      %p149 = por %p147, %p148
      %p151 = scmp.ne.s32.totalorder %s136, %s150
      %p152 = scmp.eq.s32.totalorder %s21, 0
      %p153 = por %p151, %p152
      %s154 = ssub.s32 %s15, %s22
      %p155 = scmp.eq.s32.totalorder %s154, 0
      %s157 = sadd.s32 %s156, 1
      %s158 = scalar_select %p155, %s156, %s157
      %p161 = pneg %p155
      %p162 = scmp.eq.s32.totalorder %s15, 1
      %p163 = por %p161, %p162
      %p164 = scmp.ne.s32.totalorder %s156, %s159
      %p165 = scmp.eq.s32.totalorder %s15, 0
      %p166 = por %p164, %p165
      %p167 = scmp.ne.s32.totalorder %s156, %s159
      %p168 = scmp.eq.s32.totalorder %s20, 1
      %p169 = por %p167, %p168
      %p170 = scmp.ne.s32.totalorder %s159, %s160
      %p171 = scmp.eq.s32.totalorder %s20, 0
      %p172 = por %p170, %p171
      %p173 = scmp.ne.s32.totalorder %s159, %s160
      %p174 = scmp.eq.s32.totalorder %s21, 1
      %p175 = por %p173, %p174
      %p177 = scmp.ne.s32.totalorder %s160, %s176
      %p178 = scmp.eq.s32.totalorder %s21, 0
      %p179 = por %p177, %p178
      %p180 = scmp.le.s32.totalorder 1, %s15
      %p181 = scmp.lt.s32.totalorder %s15, 3
      %p182 = pnand %p180, %p181
      %p183 = pneg %p182
      // Predicated region
      $region9: #{tpu_custom_call.1} parent=5 // pred_check
        _
      $region10: #{tpu_custom_call.1} parent=5 // pred_check_branch
        %185 = sbr.rel (%p182) target = $region12
      $region11: #{tpu_custom_call.1} parent=5 // pred_region
        %s186 = ssub.s32 %s15, 1
        // Predicated region
        $region13: #{tpu_custom_call.1} parent=11 // pred_check
          %p187 = pneg %p62
        $region14: #{tpu_custom_call.1} parent=11 // pred_check_branch
          %189 = sbr.rel (%p187) target = $region16
        $region15: #{tpu_custom_call.1} parent=11 // pred_region
          _
        $region16: #{tpu_custom_call.1} parent=11 // pred_fallthru
          _
        // Predicated region
        $region17: #{tpu_custom_call.1} parent=11 // pred_check
          %p190 = pneg %p83
        $region18: #{tpu_custom_call.1} parent=11 // pred_check_branch
          %192 = sbr.rel (%p190) target = $region20
        $region19: #{tpu_custom_call.1} parent=11 // pred_region
          _
        $region20: #{tpu_custom_call.1} parent=11 // pred_fallthru
          _
        // Predicated region
        $region21: #{tpu_custom_call.1} parent=11 // pred_check
          %p193 = pneg %p104
        $region22: #{tpu_custom_call.1} parent=11 // pred_check_branch
          %195 = sbr.rel (%p193) target = $region24
        $region23: #{tpu_custom_call.1} parent=11 // pred_region
          _
        $region24: #{tpu_custom_call.1} parent=11 // pred_fallthru
          _
        // Predicated region
        $region25: #{tpu_custom_call.1} parent=11 // pred_check
          %p196 = pneg %p125
        $region26: #{tpu_custom_call.1} parent=11 // pred_check_branch
          %198 = sbr.rel (%p196) target = $region28
        $region27: #{tpu_custom_call.1} parent=11 // pred_region
          _
        $region28: #{tpu_custom_call.1} parent=11 // pred_fallthru
          _
        // Predicated region
        $region29: #{tpu_custom_call.1} parent=11 // pred_check
          %p199 = pneg %p146
        $region30: #{tpu_custom_call.1} parent=11 // pred_check_branch
          %201 = sbr.rel (%p199) target = $region32
        $region31: #{tpu_custom_call.1} parent=11 // pred_region
          _
        $region32: #{tpu_custom_call.1} parent=11 // pred_fallthru
          _
      $region12: #{tpu_custom_call.1} parent=5 // pred_fallthru
        _
      %p202 = scmp.lt.s32.totalorder %s15, 2
      // Predicated region
      $region33: #{tpu_custom_call.1} parent=5 // pred_check
        %p203 = pneg %p202
      $region34: #{tpu_custom_call.1} parent=5 // pred_check_branch
        %205 = sbr.rel (%p203) target = $region36
      $region35: #{tpu_custom_call.1} parent=5 // pred_region
        // Predicated region
        $region37: #{tpu_custom_call.1} parent=35 // pred_check
          %p206 = pneg %p35
        $region38: #{tpu_custom_call.1} parent=35 // pred_check_branch
          %208 = sbr.rel (%p206) target = $region40
        $region39: #{tpu_custom_call.1} parent=35 // pred_region
          %p209 = scmp.lt.s32.totalorder %s15, 1
          %s210 = scalar_select %p209, %s15, 1
          %s211 = smul.addr %s210, 4
          %s212 = scalar_lea.vmem %s0, %s211
        $region40: #{tpu_custom_call.1} parent=35 // pred_fallthru
          _
      $region36: #{tpu_custom_call.1} parent=5 // pred_fallthru
        _
      %p213 = scmp.le.s32.totalorder 1, %s15
      %p214 = scmp.lt.s32.totalorder %s15, 3
      %p215 = pnand %p213, %p214
      %p216 = pneg %p215
      // Predicated region
      $region41: #{tpu_custom_call.1} parent=5 // pred_check
        _
      $region42: #{tpu_custom_call.1} parent=5 // pred_check_branch
        %218 = sbr.rel (%p215) target = $region44
      $region43: #{tpu_custom_call.1} parent=5 // pred_region
        %s219 = ssub.s32 %s15, 1
        %p220 = scmp.lt.s32.totalorder %s20, 1
        %s221 = scalar_select %p220, %s20, 1
        %s222 = smul.addr %s221, 4
        %s223 = scalar_lea.vmem %s0, %s222
        %p224 = pneg %p41
        %p225 = pneg %p38
        %p226 = pneg %p62
        %p227 = pneg %p59
        %p228 = pneg %p83
        %p229 = pneg %p80
        %p230 = pneg %p104
        %p231 = pneg %p101
        %p232 = pneg %p125
        %p233 = pneg %p122
        %p234 = pneg %p146
        %p235 = pneg %p143
        %p236 = pneg %p172
        %p237 = pneg %p169
        %s238 = sand.u32 %s159, 1
        %s239 = scalar_lea.sflag [#allocation4], %s238
        %s240 = sand.u32 %s159, 1
        %s241 = smul.addr %s240, 8
        %s242 = scalar_lea.vmem [#allocation3], %s241
        %p243 = scmp.lt.s32.totalorder %s20, 1
        %s244 = scalar_select %p243, %s20, 1
        %s245 = smul.addr %s244, 4
        %s246 = scalar_lea.vmem %s0, %s245
        %v247 = vld [vmem:[%s1] sm:$0xff]
        %v248 = vld [vmem:[%s246] sm:$0xf]
        %s249 = scalar_lea.vmem %s1, 8
        %v250 = vld [vmem:[%s249] sm:$0xff]
        %252 = vrot.lane.b32.xlu0 %v248, 127
        %v253 = vpop.permute.xlu0 %252
        %vm254 = vcmask 31744
        %v256 = vsel %vm254, %v250, 0
        %vm258 = vcmask 1043456
        %v259 = vsel %vm258, %v253, 0
        %261 = vmatprep.subr.mxu0 0.0
        %262 = vmatpush1.msra.mxu0 %v259
        %263 = vmatprep.subr.mxu0 0.0
        %264 = vmatpush1.msra.mxu0 0.0
        %265 = vmatprep.subr.mxu0 0.0
        %266 = vmatpush1.msra.mxu0 0.0
        %267 = vmatprep.subr.mxu0 0.0
        %268 = vmatpush1.msra.mxu0 0.0
        %269 = vmatprep.subr.mxu0 0.0
        %270 = vmatpush1.msra.mxu0 0.0
        %271 = vmatprep.subr.mxu0 0.0
        %272 = vmatpush1.msra.mxu0 0.0
        %273 = vmatprep.subr.mxu0 0.0
        %274 = vmatpush1.msra.mxu0 0.0
        %275 = vmatprep.subr.mxu0 0.0
        %276 = vmatpush1.msra.mxu0 0.0
        %277 = vmatprep.subr.mxu0 0.0
        %278 = vmatpush1.msra.mxu0 0.0
        %279 = vmatprep.subr.mxu0 0.0
        %280 = vmatpush1.msra.mxu0 0.0
        %281 = vmatprep.subr.mxu0 0.0
        %282 = vmatpush1.msra.mxu0 0.0
        %283 = vmatprep.subr.mxu0 0.0
        %284 = vmatpush1.msra.mxu0 0.0
        %285 = vmatprep.subr.mxu0 0.0
        %286 = vmatpush1.msra.mxu0 0.0
        %287 = vmatprep.subr.mxu0 0.0
        %288 = vmatpush1.msra.mxu0 0.0
        %289 = vmatprep.subr.mxu0 0.0
        %290 = vmatpush1.msra.mxu0 0.0
        %291 = vmatprep.subr.mxu0 0.0
        %292 = vmatpush1.msra.mxu0 0.0
        %293 = vmatprep.subr.mxu0 0.0
        %294 = vmatpush1.msra.mxu0 0.0
        %295 = vmatprep.subr.mxu0 0.0
        %296 = vmatpush1.msra.mxu0 0.0
        %297 = vmatprep.subr.mxu0 0.0
        %298 = vmatpush1.msra.mxu0 0.0
        %299 = vmatprep.subr.mxu0 0.0
        %300 = vmatpush1.msra.mxu0 0.0
        %301 = vmatprep.subr.mxu0 0.0
        %302 = vmatpush1.msra.mxu0 0.0
        %303 = vmatprep.subr.mxu0 0.0
        %304 = vmatpush1.msra.mxu0 0.0
        %305 = vmatprep.subr.mxu0 0.0
        %306 = vmatpush1.msra.mxu0 0.0
        %307 = vmatprep.subr.mxu0 0.0
        %308 = vmatpush1.msra.mxu0 0.0
        %309 = vmatprep.subr.mxu0 0.0
        %310 = vmatpush1.msra.mxu0 0.0
        %311 = vmatprep.subr.mxu0 0.0
        %312 = vmatpush1.msra.mxu0 0.0
        %313 = vmatprep.subr.mxu0 0.0
        %314 = vmatpush1.msra.mxu0 0.0
        %315 = vmatprep.subr.mxu0 0.0
        %316 = vmatpush1.msra.mxu0 0.0
        %317 = vmatprep.subr.mxu0 0.0
        %318 = vmatpush1.msra.mxu0 0.0
        %319 = vmatprep.subr.mxu0 0.0
        %320 = vmatpush1.msra.mxu0 0.0
        %321 = vmatprep.subr.mxu0 0.0
        %322 = vmatpush1.msra.mxu0 0.0
        %323 = vmatprep.subr.mxu0 0.0
        %324 = vmatpush1.msra.mxu0 0.0
        %325 = vmatprep.mubr.f32.mxu0 0.0
        %326 = vmatmul.mubr.f32.gmra.mrb[0].mxu0 %v256
        %v327 = vpop.f32.mrb[0].mxu0
        %v328 = vadd.f32 0.0, %v327
        %v329 = vpop.f32.mrb[0].mxu0
        %330 = vdwg.mxu0
        %v332 = vsel %vm254, %v247, 0
        %v334 = vsel %vm258, %v248, 0
        %336 = vmatprep.subr.mxu0 0.0
        %337 = vmatpush1.msra.mxu0 %v334
        %338 = vmatprep.subr.mxu0 0.0
        %339 = vmatpush1.msra.mxu0 0.0
        %340 = vmatprep.subr.mxu0 0.0
        %341 = vmatpush1.msra.mxu0 0.0
        %342 = vmatprep.subr.mxu0 0.0
        %343 = vmatpush1.msra.mxu0 0.0
        %344 = vmatprep.subr.mxu0 0.0
        %345 = vmatpush1.msra.mxu0 0.0
        %346 = vmatprep.subr.mxu0 0.0
        %347 = vmatpush1.msra.mxu0 0.0
        %348 = vmatprep.subr.mxu0 0.0
        %349 = vmatpush1.msra.mxu0 0.0
        %350 = vmatprep.subr.mxu0 0.0
        %351 = vmatpush1.msra.mxu0 0.0
        %352 = vmatprep.subr.mxu0 0.0
        %353 = vmatpush1.msra.mxu0 0.0
        %354 = vmatprep.subr.mxu0 0.0
        %355 = vmatpush1.msra.mxu0 0.0
        %356 = vmatprep.subr.mxu0 0.0
        %357 = vmatpush1.msra.mxu0 0.0
        %358 = vmatprep.subr.mxu0 0.0
        %359 = vmatpush1.msra.mxu0 0.0
        %360 = vmatprep.subr.mxu0 0.0
        %361 = vmatpush1.msra.mxu0 0.0
        %362 = vmatprep.subr.mxu0 0.0
        %363 = vmatpush1.msra.mxu0 0.0
        %364 = vmatprep.subr.mxu0 0.0
        %365 = vmatpush1.msra.mxu0 0.0
        %366 = vmatprep.subr.mxu0 0.0
        %367 = vmatpush1.msra.mxu0 0.0
        %368 = vmatprep.subr.mxu0 0.0
        %369 = vmatpush1.msra.mxu0 0.0
        %370 = vmatprep.subr.mxu0 0.0
        %371 = vmatpush1.msra.mxu0 0.0
        %372 = vmatprep.subr.mxu0 0.0
        %373 = vmatpush1.msra.mxu0 0.0
        %374 = vmatprep.subr.mxu0 0.0
        %375 = vmatpush1.msra.mxu0 0.0
        %376 = vmatprep.subr.mxu0 0.0
        %377 = vmatpush1.msra.mxu0 0.0
        %378 = vmatprep.subr.mxu0 0.0
        %379 = vmatpush1.msra.mxu0 0.0
        %380 = vmatprep.subr.mxu0 0.0
        %381 = vmatpush1.msra.mxu0 0.0
        %382 = vmatprep.subr.mxu0 0.0
        %383 = vmatpush1.msra.mxu0 0.0
        %384 = vmatprep.subr.mxu0 0.0
        %385 = vmatpush1.msra.mxu0 0.0
        %386 = vmatprep.subr.mxu0 0.0
        %387 = vmatpush1.msra.mxu0 0.0
        %388 = vmatprep.subr.mxu0 0.0
        %389 = vmatpush1.msra.mxu0 0.0
        %390 = vmatprep.subr.mxu0 0.0
        %391 = vmatpush1.msra.mxu0 0.0
        %392 = vmatprep.subr.mxu0 0.0
        %393 = vmatpush1.msra.mxu0 0.0
        %394 = vmatprep.subr.mxu0 0.0
        %395 = vmatpush1.msra.mxu0 0.0
        %396 = vmatprep.subr.mxu0 0.0
        %397 = vmatpush1.msra.mxu0 0.0
        %398 = vmatprep.subr.mxu0 0.0
        %399 = vmatpush1.msra.mxu0 0.0
        %400 = vmatprep.mubr.f32.mxu0 0.0
        %401 = vmatmul.mubr.f32.gmra.mrb[0].mxu0 %v332
        %v402 = vpop.f32.mrb[0].mxu0
        %v403 = vadd.f32 %v328, %v402
        %v404 = vpop.f32.mrb[0].mxu0
        %405 = vdwg.mxu0
        %s406 = scalar_lea.vmem %s1, 16
        %v407 = vld [vmem:[%s406] sm:$0xff]
        %408 = vrot.lane.b32.xlu0 %v248, 126
        %v409 = vpop.permute.xlu0 %408
        %v411 = vsel %vm254, %v407, 0
        %v413 = vsel %vm258, %v409, 0
        %415 = vmatprep.subr.mxu0 0.0
        %416 = vmatpush1.msra.mxu0 %v413
        %417 = vmatprep.subr.mxu0 0.0
        %418 = vmatpush1.msra.mxu0 0.0
        %419 = vmatprep.subr.mxu0 0.0
        %420 = vmatpush1.msra.mxu0 0.0
        %421 = vmatprep.subr.mxu0 0.0
        %422 = vmatpush1.msra.mxu0 0.0
        %423 = vmatprep.subr.mxu0 0.0
        %424 = vmatpush1.msra.mxu0 0.0
        %425 = vmatprep.subr.mxu0 0.0
        %426 = vmatpush1.msra.mxu0 0.0
        %427 = vmatprep.subr.mxu0 0.0
        %428 = vmatpush1.msra.mxu0 0.0
        %429 = vmatprep.subr.mxu0 0.0
        %430 = vmatpush1.msra.mxu0 0.0
        %431 = vmatprep.subr.mxu0 0.0
        %432 = vmatpush1.msra.mxu0 0.0
        %433 = vmatprep.subr.mxu0 0.0
        %434 = vmatpush1.msra.mxu0 0.0
        %435 = vmatprep.subr.mxu0 0.0
        %436 = vmatpush1.msra.mxu0 0.0
        %437 = vmatprep.subr.mxu0 0.0
        %438 = vmatpush1.msra.mxu0 0.0
        %439 = vmatprep.subr.mxu0 0.0
        %440 = vmatpush1.msra.mxu0 0.0
        %441 = vmatprep.subr.mxu0 0.0
        %442 = vmatpush1.msra.mxu0 0.0
        %443 = vmatprep.subr.mxu0 0.0
        %444 = vmatpush1.msra.mxu0 0.0
        %445 = vmatprep.subr.mxu0 0.0
        %446 = vmatpush1.msra.mxu0 0.0
        %447 = vmatprep.subr.mxu0 0.0
        %448 = vmatpush1.msra.mxu0 0.0
        %449 = vmatprep.subr.mxu0 0.0
        %450 = vmatpush1.msra.mxu0 0.0
        %451 = vmatprep.subr.mxu0 0.0
        %452 = vmatpush1.msra.mxu0 0.0
        %453 = vmatprep.subr.mxu0 0.0
        %454 = vmatpush1.msra.mxu0 0.0
        %455 = vmatprep.subr.mxu0 0.0
        %456 = vmatpush1.msra.mxu0 0.0
        %457 = vmatprep.subr.mxu0 0.0
        %458 = vmatpush1.msra.mxu0 0.0
        %459 = vmatprep.subr.mxu0 0.0
        %460 = vmatpush1.msra.mxu0 0.0
        %461 = vmatprep.subr.mxu0 0.0
        %462 = vmatpush1.msra.mxu0 0.0
        %463 = vmatprep.subr.mxu0 0.0
        %464 = vmatpush1.msra.mxu0 0.0
        %465 = vmatprep.subr.mxu0 0.0
        %466 = vmatpush1.msra.mxu0 0.0
        %467 = vmatprep.subr.mxu0 0.0
        %468 = vmatpush1.msra.mxu0 0.0
        %469 = vmatprep.subr.mxu0 0.0
        %470 = vmatpush1.msra.mxu0 0.0
        %471 = vmatprep.subr.mxu0 0.0
        %472 = vmatpush1.msra.mxu0 0.0
        %473 = vmatprep.subr.mxu0 0.0
        %474 = vmatpush1.msra.mxu0 0.0
        %475 = vmatprep.subr.mxu0 0.0
        %476 = vmatpush1.msra.mxu0 0.0
        %477 = vmatprep.subr.mxu0 0.0
        %478 = vmatpush1.msra.mxu0 0.0
        %479 = vmatprep.mubr.f32.mxu0 0.0
        %480 = vmatmul.mubr.f32.gmra.mrb[0].mxu0 %v411
        %v481 = vpop.f32.mrb[0].mxu0
        %v482 = vadd.f32 0.0, %v481
        %v483 = vpop.f32.mrb[0].mxu0
        %484 = vdwg.mxu0
        %v485 = vadd.f32 %v403, %v482
        %s486 = scalar_lea.vmem %s1, 24
        %v487 = vld [vmem:[%s486] sm:$0xff]
        %488 = vrot.lane.b32.xlu0 %v248, 118
        %v489 = vpop.permute.xlu0 %488
        %v491 = vsel %vm254, %v487, 0
        %v493 = vsel %vm258, %v489, 0
        %495 = vmatprep.subr.mxu0 0.0
        %496 = vmatpush1.msra.mxu0 %v493
        %497 = vmatprep.subr.mxu0 0.0
        %498 = vmatpush1.msra.mxu0 0.0
        %499 = vmatprep.subr.mxu0 0.0
        %500 = vmatpush1.msra.mxu0 0.0
        %501 = vmatprep.subr.mxu0 0.0
        %502 = vmatpush1.msra.mxu0 0.0
        %503 = vmatprep.subr.mxu0 0.0
        %504 = vmatpush1.msra.mxu0 0.0
        %505 = vmatprep.subr.mxu0 0.0
        %506 = vmatpush1.msra.mxu0 0.0
        %507 = vmatprep.subr.mxu0 0.0
        %508 = vmatpush1.msra.mxu0 0.0
        %509 = vmatprep.subr.mxu0 0.0
        %510 = vmatpush1.msra.mxu0 0.0
        %511 = vmatprep.subr.mxu0 0.0
        %512 = vmatpush1.msra.mxu0 0.0
        %513 = vmatprep.subr.mxu0 0.0
        %514 = vmatpush1.msra.mxu0 0.0
        %515 = vmatprep.subr.mxu0 0.0
        %516 = vmatpush1.msra.mxu0 0.0
        %517 = vmatprep.subr.mxu0 0.0
        %518 = vmatpush1.msra.mxu0 0.0
        %519 = vmatprep.subr.mxu0 0.0
        %520 = vmatpush1.msra.mxu0 0.0
        %521 = vmatprep.subr.mxu0 0.0
        %522 = vmatpush1.msra.mxu0 0.0
        %523 = vmatprep.subr.mxu0 0.0
        %524 = vmatpush1.msra.mxu0 0.0
        %525 = vmatprep.subr.mxu0 0.0
        %526 = vmatpush1.msra.mxu0 0.0
        %527 = vmatprep.subr.mxu0 0.0
        %528 = vmatpush1.msra.mxu0 0.0
        %529 = vmatprep.subr.mxu0 0.0
        %530 = vmatpush1.msra.mxu0 0.0
        %531 = vmatprep.subr.mxu0 0.0
        %532 = vmatpush1.msra.mxu0 0.0
        %533 = vmatprep.subr.mxu0 0.0
        %534 = vmatpush1.msra.mxu0 0.0
        %535 = vmatprep.subr.mxu0 0.0
        %536 = vmatpush1.msra.mxu0 0.0
        %537 = vmatprep.subr.mxu0 0.0
        %538 = vmatpush1.msra.mxu0 0.0
        %539 = vmatprep.subr.mxu0 0.0
        %540 = vmatpush1.msra.mxu0 0.0
        %541 = vmatprep.subr.mxu0 0.0
        %542 = vmatpush1.msra.mxu0 0.0
        %543 = vmatprep.subr.mxu0 0.0
        %544 = vmatpush1.msra.mxu0 0.0
        %545 = vmatprep.subr.mxu0 0.0
        %546 = vmatpush1.msra.mxu0 0.0
        %547 = vmatprep.subr.mxu0 0.0
        %548 = vmatpush1.msra.mxu0 0.0
        %549 = vmatprep.subr.mxu0 0.0
        %550 = vmatpush1.msra.mxu0 0.0
        %551 = vmatprep.subr.mxu0 0.0
        %552 = vmatpush1.msra.mxu0 0.0
        %553 = vmatprep.subr.mxu0 0.0
        %554 = vmatpush1.msra.mxu0 0.0
        %555 = vmatprep.subr.mxu0 0.0
        %556 = vmatpush1.msra.mxu0 0.0
        %557 = vmatprep.subr.mxu0 0.0
        %558 = vmatpush1.msra.mxu0 0.0
        %559 = vmatprep.mubr.f32.mxu0 0.0
        %560 = vmatmul.mubr.f32.gmra.mrb[0].mxu0 %v491
        %v561 = vpop.f32.mrb[0].mxu0
        %v562 = vadd.f32 0.0, %v561
        %v563 = vpop.f32.mrb[0].mxu0
        %564 = vdwg.mxu0
        %v565 = vadd.f32 %v485, %v562
        %s566 = scalar_lea.vmem %s1, 32
        %v567 = vld [vmem:[%s566] sm:$0xff]
        %568 = vrot.lane.b32.xlu0 %v248, 117
        %v569 = vpop.permute.xlu0 %568
        %v571 = vsel %vm254, %v567, 0
        %v573 = vsel %vm258, %v569, 0
        %575 = vmatprep.subr.mxu0 0.0
        %576 = vmatpush1.msra.mxu0 %v573
        %577 = vmatprep.subr.mxu0 0.0
        %578 = vmatpush1.msra.mxu0 0.0
        %579 = vmatprep.subr.mxu0 0.0
        %580 = vmatpush1.msra.mxu0 0.0
        %581 = vmatprep.subr.mxu0 0.0
        %582 = vmatpush1.msra.mxu0 0.0
        %583 = vmatprep.subr.mxu0 0.0
        %584 = vmatpush1.msra.mxu0 0.0
        %585 = vmatprep.subr.mxu0 0.0
        %586 = vmatpush1.msra.mxu0 0.0
        %587 = vmatprep.subr.mxu0 0.0
        %588 = vmatpush1.msra.mxu0 0.0
        %589 = vmatprep.subr.mxu0 0.0
        %590 = vmatpush1.msra.mxu0 0.0
        %591 = vmatprep.subr.mxu0 0.0
        %592 = vmatpush1.msra.mxu0 0.0
        %593 = vmatprep.subr.mxu0 0.0
        %594 = vmatpush1.msra.mxu0 0.0
        %595 = vmatprep.subr.mxu0 0.0
        %596 = vmatpush1.msra.mxu0 0.0
        %597 = vmatprep.subr.mxu0 0.0
        %598 = vmatpush1.msra.mxu0 0.0
        %599 = vmatprep.subr.mxu0 0.0
        %600 = vmatpush1.msra.mxu0 0.0
        %601 = vmatprep.subr.mxu0 0.0
        %602 = vmatpush1.msra.mxu0 0.0
        %603 = vmatprep.subr.mxu0 0.0
        %604 = vmatpush1.msra.mxu0 0.0
        %605 = vmatprep.subr.mxu0 0.0
        %606 = vmatpush1.msra.mxu0 0.0
        %607 = vmatprep.subr.mxu0 0.0
        %608 = vmatpush1.msra.mxu0 0.0
        %609 = vmatprep.subr.mxu0 0.0
        %610 = vmatpush1.msra.mxu0 0.0
        %611 = vmatprep.subr.mxu0 0.0
        %612 = vmatpush1.msra.mxu0 0.0
        %613 = vmatprep.subr.mxu0 0.0
        %614 = vmatpush1.msra.mxu0 0.0
        %615 = vmatprep.subr.mxu0 0.0
        %616 = vmatpush1.msra.mxu0 0.0
        %617 = vmatprep.subr.mxu0 0.0
        %618 = vmatpush1.msra.mxu0 0.0
        %619 = vmatprep.subr.mxu0 0.0
        %620 = vmatpush1.msra.mxu0 0.0
        %621 = vmatprep.subr.mxu0 0.0
        %622 = vmatpush1.msra.mxu0 0.0
        %623 = vmatprep.subr.mxu0 0.0
        %624 = vmatpush1.msra.mxu0 0.0
        %625 = vmatprep.subr.mxu0 0.0
        %626 = vmatpush1.msra.mxu0 0.0
        %627 = vmatprep.subr.mxu0 0.0
        %628 = vmatpush1.msra.mxu0 0.0
        %629 = vmatprep.subr.mxu0 0.0
        %630 = vmatpush1.msra.mxu0 0.0
        %631 = vmatprep.subr.mxu0 0.0
        %632 = vmatpush1.msra.mxu0 0.0
        %633 = vmatprep.subr.mxu0 0.0
        %634 = vmatpush1.msra.mxu0 0.0
        %635 = vmatprep.subr.mxu0 0.0
        %636 = vmatpush1.msra.mxu0 0.0
        %637 = vmatprep.subr.mxu0 0.0
        %638 = vmatpush1.msra.mxu0 0.0
        %639 = vmatprep.mubr.f32.mxu0 0.0
        %640 = vmatmul.mubr.f32.gmra.mrb[0].mxu0 %v571
        %v641 = vpop.f32.mrb[0].mxu0
        %v642 = vadd.f32 0.0, %v641
        %v643 = vpop.f32.mrb[0].mxu0
        %644 = vdwg.mxu0
        %v645 = vadd.f32 %v565, %v642
        %s646 = scalar_lea.vmem %s1, 40
        %v647 = vld [vmem:[%s646] sm:$0xff]
        %648 = vrot.lane.b32.xlu0 %v248, 116
        %v649 = vpop.permute.xlu0 %648
        %v651 = vsel %vm254, %v647, 0
        %v653 = vsel %vm258, %v649, 0
        %655 = vmatprep.subr.mxu0 0.0
        %656 = vmatpush1.msra.mxu0 %v653
        %657 = vmatprep.subr.mxu0 0.0
        %658 = vmatpush1.msra.mxu0 0.0
        %659 = vmatprep.subr.mxu0 0.0
        %660 = vmatpush1.msra.mxu0 0.0
        %661 = vmatprep.subr.mxu0 0.0
        %662 = vmatpush1.msra.mxu0 0.0
        %663 = vmatprep.subr.mxu0 0.0
        %664 = vmatpush1.msra.mxu0 0.0
        %665 = vmatprep.subr.mxu0 0.0
        %666 = vmatpush1.msra.mxu0 0.0
        %667 = vmatprep.subr.mxu0 0.0
        %668 = vmatpush1.msra.mxu0 0.0
        %669 = vmatprep.subr.mxu0 0.0
        %670 = vmatpush1.msra.mxu0 0.0
        %671 = vmatprep.subr.mxu0 0.0
        %672 = vmatpush1.msra.mxu0 0.0
        %673 = vmatprep.subr.mxu0 0.0
        %674 = vmatpush1.msra.mxu0 0.0
        %675 = vmatprep.subr.mxu0 0.0
        %676 = vmatpush1.msra.mxu0 0.0
        %677 = vmatprep.subr.mxu0 0.0
        %678 = vmatpush1.msra.mxu0 0.0
        %679 = vmatprep.subr.mxu0 0.0
        %680 = vmatpush1.msra.mxu0 0.0
        %681 = vmatprep.subr.mxu0 0.0
        %682 = vmatpush1.msra.mxu0 0.0
        %683 = vmatprep.subr.mxu0 0.0
        %684 = vmatpush1.msra.mxu0 0.0
        %685 = vmatprep.subr.mxu0 0.0
        %686 = vmatpush1.msra.mxu0 0.0
        %687 = vmatprep.subr.mxu0 0.0
        %688 = vmatpush1.msra.mxu0 0.0
        %689 = vmatprep.subr.mxu0 0.0
        %690 = vmatpush1.msra.mxu0 0.0
        %691 = vmatprep.subr.mxu0 0.0
        %692 = vmatpush1.msra.mxu0 0.0
        %693 = vmatprep.subr.mxu0 0.0
        %694 = vmatpush1.msra.mxu0 0.0
        %695 = vmatprep.subr.mxu0 0.0
        %696 = vmatpush1.msra.mxu0 0.0
        %697 = vmatprep.subr.mxu0 0.0
        %698 = vmatpush1.msra.mxu0 0.0
        %699 = vmatprep.subr.mxu0 0.0
        %700 = vmatpush1.msra.mxu0 0.0
        %701 = vmatprep.subr.mxu0 0.0
        %702 = vmatpush1.msra.mxu0 0.0
        %703 = vmatprep.subr.mxu0 0.0
        %704 = vmatpush1.msra.mxu0 0.0
        %705 = vmatprep.subr.mxu0 0.0
        %706 = vmatpush1.msra.mxu0 0.0
        %707 = vmatprep.subr.mxu0 0.0
        %708 = vmatpush1.msra.mxu0 0.0
        %709 = vmatprep.subr.mxu0 0.0
        %710 = vmatpush1.msra.mxu0 0.0
        %711 = vmatprep.subr.mxu0 0.0
        %712 = vmatpush1.msra.mxu0 0.0
        %713 = vmatprep.subr.mxu0 0.0
        %714 = vmatpush1.msra.mxu0 0.0
        %715 = vmatprep.subr.mxu0 0.0
        %716 = vmatpush1.msra.mxu0 0.0
        %717 = vmatprep.subr.mxu0 0.0
        %718 = vmatpush1.msra.mxu0 0.0
        %719 = vmatprep.mubr.f32.mxu0 0.0
        %720 = vmatmul.mubr.f32.gmra.mrb[0].mxu0 %v651
        %v721 = vpop.f32.mrb[0].mxu0
        %v722 = vadd.f32 0.0, %v721
        %v723 = vpop.f32.mrb[0].mxu0
        %724 = vdwg.mxu0
        %v725 = vadd.f32 %v645, %v722
        %s726 = scalar_lea.vmem %s1, 48
        %v727 = vld [vmem:[%s726] sm:$0xff]
        %728 = vrot.lane.b32.xlu0 %v248, 108
        %v729 = vpop.permute.xlu0 %728
        %v731 = vsel %vm254, %v727, 0
        %v733 = vsel %vm258, %v729, 0
        %735 = vmatprep.subr.mxu0 0.0
        %736 = vmatpush1.msra.mxu0 %v733
        %737 = vmatprep.subr.mxu0 0.0
        %738 = vmatpush1.msra.mxu0 0.0
        %739 = vmatprep.subr.mxu0 0.0
        %740 = vmatpush1.msra.mxu0 0.0
        %741 = vmatprep.subr.mxu0 0.0
        %742 = vmatpush1.msra.mxu0 0.0
        %743 = vmatprep.subr.mxu0 0.0
        %744 = vmatpush1.msra.mxu0 0.0
        %745 = vmatprep.subr.mxu0 0.0
        %746 = vmatpush1.msra.mxu0 0.0
        %747 = vmatprep.subr.mxu0 0.0
        %748 = vmatpush1.msra.mxu0 0.0
        %749 = vmatprep.subr.mxu0 0.0
        %750 = vmatpush1.msra.mxu0 0.0
        %751 = vmatprep.subr.mxu0 0.0
        %752 = vmatpush1.msra.mxu0 0.0
        %753 = vmatprep.subr.mxu0 0.0
        %754 = vmatpush1.msra.mxu0 0.0
        %755 = vmatprep.subr.mxu0 0.0
        %756 = vmatpush1.msra.mxu0 0.0
        %757 = vmatprep.subr.mxu0 0.0
        %758 = vmatpush1.msra.mxu0 0.0
        %759 = vmatprep.subr.mxu0 0.0
        %760 = vmatpush1.msra.mxu0 0.0
        %761 = vmatprep.subr.mxu0 0.0
        %762 = vmatpush1.msra.mxu0 0.0
        %763 = vmatprep.subr.mxu0 0.0
        %764 = vmatpush1.msra.mxu0 0.0
        %765 = vmatprep.subr.mxu0 0.0
        %766 = vmatpush1.msra.mxu0 0.0
        %767 = vmatprep.subr.mxu0 0.0
        %768 = vmatpush1.msra.mxu0 0.0
        %769 = vmatprep.subr.mxu0 0.0
        %770 = vmatpush1.msra.mxu0 0.0
        %771 = vmatprep.subr.mxu0 0.0
        %772 = vmatpush1.msra.mxu0 0.0
        %773 = vmatprep.subr.mxu0 0.0
        %774 = vmatpush1.msra.mxu0 0.0
        %775 = vmatprep.subr.mxu0 0.0
        %776 = vmatpush1.msra.mxu0 0.0
        %777 = vmatprep.subr.mxu0 0.0
        %778 = vmatpush1.msra.mxu0 0.0
        %779 = vmatprep.subr.mxu0 0.0
        %780 = vmatpush1.msra.mxu0 0.0
        %781 = vmatprep.subr.mxu0 0.0
        %782 = vmatpush1.msra.mxu0 0.0
        %783 = vmatprep.subr.mxu0 0.0
        %784 = vmatpush1.msra.mxu0 0.0
        %785 = vmatprep.subr.mxu0 0.0
        %786 = vmatpush1.msra.mxu0 0.0
        %787 = vmatprep.subr.mxu0 0.0
        %788 = vmatpush1.msra.mxu0 0.0
        %789 = vmatprep.subr.mxu0 0.0
        %790 = vmatpush1.msra.mxu0 0.0
        %791 = vmatprep.subr.mxu0 0.0
        %792 = vmatpush1.msra.mxu0 0.0
        %793 = vmatprep.subr.mxu0 0.0
        %794 = vmatpush1.msra.mxu0 0.0
        %795 = vmatprep.subr.mxu0 0.0
        %796 = vmatpush1.msra.mxu0 0.0
        %797 = vmatprep.subr.mxu0 0.0
        %798 = vmatpush1.msra.mxu0 0.0
        %799 = vmatprep.mubr.f32.mxu0 0.0
        %800 = vmatmul.mubr.f32.gmra.mrb[0].mxu0 %v731
        %v801 = vpop.f32.mrb[0].mxu0
        %v802 = vadd.f32 0.0, %v801
        %v803 = vpop.f32.mrb[0].mxu0
        %804 = vdwg.mxu0
        %v805 = vadd.f32 %v725, %v802
        %s806 = scalar_lea.vmem %s1, 56
        %v807 = vld [vmem:[%s806] sm:$0xff]
        %808 = vrot.lane.b32.xlu0 %v248, 107
        %v809 = vpop.permute.xlu0 %808
        %v811 = vsel %vm254, %v807, 0
        %v813 = vsel %vm258, %v809, 0
        %815 = vmatprep.subr.mxu0 0.0
        %816 = vmatpush1.msra.mxu0 %v813
        %817 = vmatprep.subr.mxu0 0.0
        %818 = vmatpush1.msra.mxu0 0.0
        %819 = vmatprep.subr.mxu0 0.0
        %820 = vmatpush1.msra.mxu0 0.0
        %821 = vmatprep.subr.mxu0 0.0
        %822 = vmatpush1.msra.mxu0 0.0
        %823 = vmatprep.subr.mxu0 0.0
        %824 = vmatpush1.msra.mxu0 0.0
        %825 = vmatprep.subr.mxu0 0.0
        %826 = vmatpush1.msra.mxu0 0.0
        %827 = vmatprep.subr.mxu0 0.0
        %828 = vmatpush1.msra.mxu0 0.0
        %829 = vmatprep.subr.mxu0 0.0
        %830 = vmatpush1.msra.mxu0 0.0
        %831 = vmatprep.subr.mxu0 0.0
        %832 = vmatpush1.msra.mxu0 0.0
        %833 = vmatprep.subr.mxu0 0.0
        %834 = vmatpush1.msra.mxu0 0.0
        %835 = vmatprep.subr.mxu0 0.0
        %836 = vmatpush1.msra.mxu0 0.0
        %837 = vmatprep.subr.mxu0 0.0
        %838 = vmatpush1.msra.mxu0 0.0
        %839 = vmatprep.subr.mxu0 0.0
        %840 = vmatpush1.msra.mxu0 0.0
        %841 = vmatprep.subr.mxu0 0.0
        %842 = vmatpush1.msra.mxu0 0.0
        %843 = vmatprep.subr.mxu0 0.0
        %844 = vmatpush1.msra.mxu0 0.0
        %845 = vmatprep.subr.mxu0 0.0
        %846 = vmatpush1.msra.mxu0 0.0
        %847 = vmatprep.subr.mxu0 0.0
        %848 = vmatpush1.msra.mxu0 0.0
        %849 = vmatprep.subr.mxu0 0.0
        %850 = vmatpush1.msra.mxu0 0.0
        %851 = vmatprep.subr.mxu0 0.0
        %852 = vmatpush1.msra.mxu0 0.0
        %853 = vmatprep.subr.mxu0 0.0
        %854 = vmatpush1.msra.mxu0 0.0
        %855 = vmatprep.subr.mxu0 0.0
        %856 = vmatpush1.msra.mxu0 0.0
        %857 = vmatprep.subr.mxu0 0.0
        %858 = vmatpush1.msra.mxu0 0.0
        %859 = vmatprep.subr.mxu0 0.0
        %860 = vmatpush1.msra.mxu0 0.0
        %861 = vmatprep.subr.mxu0 0.0
        %862 = vmatpush1.msra.mxu0 0.0
        %863 = vmatprep.subr.mxu0 0.0
        %864 = vmatpush1.msra.mxu0 0.0
        %865 = vmatprep.subr.mxu0 0.0
        %866 = vmatpush1.msra.mxu0 0.0
        %867 = vmatprep.subr.mxu0 0.0
        %868 = vmatpush1.msra.mxu0 0.0
        %869 = vmatprep.subr.mxu0 0.0
        %870 = vmatpush1.msra.mxu0 0.0
        %871 = vmatprep.subr.mxu0 0.0
        %872 = vmatpush1.msra.mxu0 0.0
        %873 = vmatprep.subr.mxu0 0.0
        %874 = vmatpush1.msra.mxu0 0.0
        %875 = vmatprep.subr.mxu0 0.0
        %876 = vmatpush1.msra.mxu0 0.0
        %877 = vmatprep.subr.mxu0 0.0
        %878 = vmatpush1.msra.mxu0 0.0
        %879 = vmatprep.mubr.f32.mxu0 0.0
        %880 = vmatmul.mubr.f32.gmra.mrb[0].mxu0 %v811
        %v881 = vpop.f32.mrb[0].mxu0
        %v882 = vadd.f32 0.0, %v881
        %v883 = vpop.f32.mrb[0].mxu0
        %884 = vdwg.mxu0
        %v885 = vadd.f32 %v805, %v882
        %s886 = scalar_lea.vmem %s1, 64
        %v887 = vld [vmem:[%s886] sm:$0xff]
        %888 = vrot.lane.b32.xlu0 %v248, 106
        %v889 = vpop.permute.xlu0 %888
        %v891 = vsel %vm254, %v887, 0
        %v893 = vsel %vm258, %v889, 0
        %895 = vmatprep.subr.mxu0 0.0
        %896 = vmatpush1.msra.mxu0 %v893
        %897 = vmatprep.subr.mxu0 0.0
        %898 = vmatpush1.msra.mxu0 0.0
        %899 = vmatprep.subr.mxu0 0.0
        %900 = vmatpush1.msra.mxu0 0.0
        %901 = vmatprep.subr.mxu0 0.0
        %902 = vmatpush1.msra.mxu0 0.0
        %903 = vmatprep.subr.mxu0 0.0
        %904 = vmatpush1.msra.mxu0 0.0
        %905 = vmatprep.subr.mxu0 0.0
        %906 = vmatpush1.msra.mxu0 0.0
        %907 = vmatprep.subr.mxu0 0.0
        %908 = vmatpush1.msra.mxu0 0.0
        %909 = vmatprep.subr.mxu0 0.0
        %910 = vmatpush1.msra.mxu0 0.0
        %911 = vmatprep.subr.mxu0 0.0
        %912 = vmatpush1.msra.mxu0 0.0
        %913 = vmatprep.subr.mxu0 0.0
        %914 = vmatpush1.msra.mxu0 0.0
        %915 = vmatprep.subr.mxu0 0.0
        %916 = vmatpush1.msra.mxu0 0.0
        %917 = vmatprep.subr.mxu0 0.0
        %918 = vmatpush1.msra.mxu0 0.0
        %919 = vmatprep.subr.mxu0 0.0
        %920 = vmatpush1.msra.mxu0 0.0
        %921 = vmatprep.subr.mxu0 0.0
        %922 = vmatpush1.msra.mxu0 0.0
        %923 = vmatprep.subr.mxu0 0.0
        %924 = vmatpush1.msra.mxu0 0.0
        %925 = vmatprep.subr.mxu0 0.0
        %926 = vmatpush1.msra.mxu0 0.0
        %927 = vmatprep.subr.mxu0 0.0
        %928 = vmatpush1.msra.mxu0 0.0
        %929 = vmatprep.subr.mxu0 0.0
        %930 = vmatpush1.msra.mxu0 0.0
        %931 = vmatprep.subr.mxu0 0.0
        %932 = vmatpush1.msra.mxu0 0.0
        %933 = vmatprep.subr.mxu0 0.0
        %934 = vmatpush1.msra.mxu0 0.0
        %935 = vmatprep.subr.mxu0 0.0
        %936 = vmatpush1.msra.mxu0 0.0
        %937 = vmatprep.subr.mxu0 0.0
        %938 = vmatpush1.msra.mxu0 0.0
        %939 = vmatprep.subr.mxu0 0.0
        %940 = vmatpush1.msra.mxu0 0.0
        %941 = vmatprep.subr.mxu0 0.0
        %942 = vmatpush1.msra.mxu0 0.0
        %943 = vmatprep.subr.mxu0 0.0
        %944 = vmatpush1.msra.mxu0 0.0
        %945 = vmatprep.subr.mxu0 0.0
        %946 = vmatpush1.msra.mxu0 0.0
        %947 = vmatprep.subr.mxu0 0.0
        %948 = vmatpush1.msra.mxu0 0.0
        %949 = vmatprep.subr.mxu0 0.0
        %950 = vmatpush1.msra.mxu0 0.0
        %951 = vmatprep.subr.mxu0 0.0
        %952 = vmatpush1.msra.mxu0 0.0
        %953 = vmatprep.subr.mxu0 0.0
        %954 = vmatpush1.msra.mxu0 0.0
        %955 = vmatprep.subr.mxu0 0.0
        %956 = vmatpush1.msra.mxu0 0.0
        %957 = vmatprep.subr.mxu0 0.0
        %958 = vmatpush1.msra.mxu0 0.0
        %959 = vmatprep.mubr.f32.mxu0 0.0
        %960 = vmatmul.mubr.f32.gmra.mrb[0].mxu0 %v891
        %v961 = vpop.f32.mrb[0].mxu0
        %v962 = vadd.f32 0.0, %v961
        %v963 = vpop.f32.mrb[0].mxu0
        %964 = vdwg.mxu0
        %v965 = vadd.f32 %v885, %v962
        %v966 = vld [vmem:[%s2] sm:$0xff]
        %968 = vset.pattern.permute.xlu0 0
        %969 = vperm.xlu0 %968, %v966
        %v970 = vpop.permute.xlu0 %969
        %v972 = vadd.f32 %v965, %v970
        %v973 = vmul.f32 %v972, 0.01
        %v974 = vmax.f32 %v972, %v973
        %v975 = vld [vmem:[%s5] sm:$0x1]
        %v977 = vlaneseq
        %v978 = vshrl.u32 %v977, 7
        %v979 = vsub.s32 0, %v978
        %v980 = vrot.slane %v975, %v979
        %v982 = vmul.f32 %v974, %v980
        %vm983 = vcmask 89088
        %984 = vst.msk [vmem:[#allocation2] sm:$0xff] %vm983, 0.0
        %vm985 = vcmask 835288
        %986 = vst.msk [vmem:[#allocation2] sm:$0xff] %vm985, 0.0
        %988 = vrot.lane.b32.xlu0 %v982, 11
        %v989 = vpop.permute.xlu0 %988
        %vm991 = vcmask 744536
        %992 = vst.msk [vmem:[#allocation2] sm:$0xff] %vm991, %v989
        %v993 = vld [vmem:[%s3] sm:$0xff]
        %v994 = vld [vmem:[#allocation2] sm:$0xff]
        %s995 = scalar_lea.vmem %s3, 8
        %v996 = vld [vmem:[%s995] sm:$0xff]
        %998 = vrot.lane.b32.xlu0 %v994, 127
        %v999 = vpop.permute.xlu0 %998
        %vm1001 = vcmask 64512
        %v1003 = vsel %vm1001, %v996, 0
        %1005 = vmatprep.subr.mxu0 0.0
        %1006 = vmatpush1.msra.mxu0 %v999
        %1007 = vmatprep.subr.mxu0 0.0
        %1008 = vmatpush1.msra.mxu0 0.0
        %1009 = vmatprep.subr.mxu0 0.0
        %1010 = vmatpush1.msra.mxu0 0.0
        %1011 = vmatprep.subr.mxu0 0.0
        %1012 = vmatpush1.msra.mxu0 0.0
        %1013 = vmatprep.subr.mxu0 0.0
        %1014 = vmatpush1.msra.mxu0 0.0
        %1015 = vmatprep.subr.mxu0 0.0
        %1016 = vmatpush1.msra.mxu0 0.0
        %1017 = vmatprep.subr.mxu0 0.0
        %1018 = vmatpush1.msra.mxu0 0.0
        %1019 = vmatprep.subr.mxu0 0.0
        %1020 = vmatpush1.msra.mxu0 0.0
        %1021 = vmatprep.subr.mxu0 0.0
        %1022 = vmatpush1.msra.mxu0 0.0
        %1023 = vmatprep.subr.mxu0 0.0
        %1024 = vmatpush1.msra.mxu0 0.0
        %1025 = vmatprep.subr.mxu0 0.0
        %1026 = vmatpush1.msra.mxu0 0.0
        %1027 = vmatprep.subr.mxu0 0.0
        %1028 = vmatpush1.msra.mxu0 0.0
        %1029 = vmatprep.subr.mxu0 0.0
        %1030 = vmatpush1.msra.mxu0 0.0
        %1031 = vmatprep.subr.mxu0 0.0
        %1032 = vmatpush1.msra.mxu0 0.0
        %1033 = vmatprep.subr.mxu0 0.0
        %1034 = vmatpush1.msra.mxu0 0.0
        %1035 = vmatprep.subr.mxu0 0.0
        %1036 = vmatpush1.msra.mxu0 0.0
        %1037 = vmatprep.subr.mxu0 0.0
        %1038 = vmatpush1.msra.mxu0 0.0
        %1039 = vmatprep.subr.mxu0 0.0
        %1040 = vmatpush1.msra.mxu0 0.0
        %1041 = vmatprep.subr.mxu0 0.0
        %1042 = vmatpush1.msra.mxu0 0.0
        %1043 = vmatprep.subr.mxu0 0.0
        %1044 = vmatpush1.msra.mxu0 0.0
        %1045 = vmatprep.subr.mxu0 0.0
        %1046 = vmatpush1.msra.mxu0 0.0
        %1047 = vmatprep.subr.mxu0 0.0
        %1048 = vmatpush1.msra.mxu0 0.0
        %1049 = vmatprep.subr.mxu0 0.0
        %1050 = vmatpush1.msra.mxu0 0.0
        %1051 = vmatprep.subr.mxu0 0.0
        %1052 = vmatpush1.msra.mxu0 0.0
        %1053 = vmatprep.subr.mxu0 0.0
        %1054 = vmatpush1.msra.mxu0 0.0
        %1055 = vmatprep.subr.mxu0 0.0
        %1056 = vmatpush1.msra.mxu0 0.0
        %1057 = vmatprep.subr.mxu0 0.0
        %1058 = vmatpush1.msra.mxu0 0.0
        %1059 = vmatprep.subr.mxu0 0.0
        %1060 = vmatpush1.msra.mxu0 0.0
        %1061 = vmatprep.subr.mxu0 0.0
        %1062 = vmatpush1.msra.mxu0 0.0
        %1063 = vmatprep.subr.mxu0 0.0
        %1064 = vmatpush1.msra.mxu0 0.0
        %1065 = vmatprep.subr.mxu0 0.0
        %1066 = vmatpush1.msra.mxu0 0.0
        %1067 = vmatprep.subr.mxu0 0.0
        %1068 = vmatpush1.msra.mxu0 0.0
        %1069 = vmatprep.mubr.f32.mxu0 0.0
        %1070 = vmatmul.mubr.f32.gmra.mrb[0].mxu0 %v1003
        %v1071 = vpop.f32.mrb[0].mxu0
        %v1072 = vadd.f32 0.0, %v1071
        %v1073 = vpop.f32.mrb[0].mxu0
        %1074 = vdwg.mxu0
        %v1076 = vsel %vm1001, %v993, 0
        %1078 = vmatprep.subr.mxu0 0.0
        %1079 = vmatpush1.msra.mxu0 %v994
        %1080 = vmatprep.subr.mxu0 0.0
        %1081 = vmatpush1.msra.mxu0 0.0
        %1082 = vmatprep.subr.mxu0 0.0
        %1083 = vmatpush1.msra.mxu0 0.0
        %1084 = vmatprep.subr.mxu0 0.0
        %1085 = vmatpush1.msra.mxu0 0.0
        %1086 = vmatprep.subr.mxu0 0.0
        %1087 = vmatpush1.msra.mxu0 0.0
        %1088 = vmatprep.subr.mxu0 0.0
        %1089 = vmatpush1.msra.mxu0 0.0
        %1090 = vmatprep.subr.mxu0 0.0
        %1091 = vmatpush1.msra.mxu0 0.0
        %1092 = vmatprep.subr.mxu0 0.0
        %1093 = vmatpush1.msra.mxu0 0.0
        %1094 = vmatprep.subr.mxu0 0.0
        %1095 = vmatpush1.msra.mxu0 0.0
        %1096 = vmatprep.subr.mxu0 0.0
        %1097 = vmatpush1.msra.mxu0 0.0
        %1098 = vmatprep.subr.mxu0 0.0
        %1099 = vmatpush1.msra.mxu0 0.0
        %1100 = vmatprep.subr.mxu0 0.0
        %1101 = vmatpush1.msra.mxu0 0.0
        %1102 = vmatprep.subr.mxu0 0.0
        %1103 = vmatpush1.msra.mxu0 0.0
        %1104 = vmatprep.subr.mxu0 0.0
        %1105 = vmatpush1.msra.mxu0 0.0
        %1106 = vmatprep.subr.mxu0 0.0
        %1107 = vmatpush1.msra.mxu0 0.0
        %1108 = vmatprep.subr.mxu0 0.0
        %1109 = vmatpush1.msra.mxu0 0.0
        %1110 = vmatprep.subr.mxu0 0.0
        %1111 = vmatpush1.msra.mxu0 0.0
        %1112 = vmatprep.subr.mxu0 0.0
        %1113 = vmatpush1.msra.mxu0 0.0
        %1114 = vmatprep.subr.mxu0 0.0
        %1115 = vmatpush1.msra.mxu0 0.0
        %1116 = vmatprep.subr.mxu0 0.0
        %1117 = vmatpush1.msra.mxu0 0.0
        %1118 = vmatprep.subr.mxu0 0.0
        %1119 = vmatpush1.msra.mxu0 0.0
        %1120 = vmatprep.subr.mxu0 0.0
        %1121 = vmatpush1.msra.mxu0 0.0
        %1122 = vmatprep.subr.mxu0 0.0
        %1123 = vmatpush1.msra.mxu0 0.0
        %1124 = vmatprep.subr.mxu0 0.0
        %1125 = vmatpush1.msra.mxu0 0.0
        %1126 = vmatprep.subr.mxu0 0.0
        %1127 = vmatpush1.msra.mxu0 0.0
        %1128 = vmatprep.subr.mxu0 0.0
        %1129 = vmatpush1.msra.mxu0 0.0
        %1130 = vmatprep.subr.mxu0 0.0
        %1131 = vmatpush1.msra.mxu0 0.0
        %1132 = vmatprep.subr.mxu0 0.0
        %1133 = vmatpush1.msra.mxu0 0.0
        %1134 = vmatprep.subr.mxu0 0.0
        %1135 = vmatpush1.msra.mxu0 0.0
        %1136 = vmatprep.subr.mxu0 0.0
        %1137 = vmatpush1.msra.mxu0 0.0
        %1138 = vmatprep.subr.mxu0 0.0
        %1139 = vmatpush1.msra.mxu0 0.0
        %1140 = vmatprep.subr.mxu0 0.0
        %1141 = vmatpush1.msra.mxu0 0.0
        %1142 = vmatprep.mubr.f32.mxu0 0.0
        %1143 = vmatmul.mubr.f32.gmra.mrb[0].mxu0 %v1076
        %v1144 = vpop.f32.mrb[0].mxu0
        %v1145 = vadd.f32 %v1072, %v1144
        %v1146 = vpop.f32.mrb[0].mxu0
        %1147 = vdwg.mxu0
        %s1148 = scalar_lea.vmem %s3, 16
        %v1149 = vld [vmem:[%s1148] sm:$0xff]
        %1150 = vrot.lane.b32.xlu0 %v994, 126
        %v1151 = vpop.permute.xlu0 %1150
        %v1154 = vsel %vm1001, %v1149, 0
        %1156 = vmatprep.subr.mxu0 0.0
        %1157 = vmatpush1.msra.mxu0 %v1151
        %1158 = vmatprep.subr.mxu0 0.0
        %1159 = vmatpush1.msra.mxu0 0.0
        %1160 = vmatprep.subr.mxu0 0.0
        %1161 = vmatpush1.msra.mxu0 0.0
        %1162 = vmatprep.subr.mxu0 0.0
        %1163 = vmatpush1.msra.mxu0 0.0
        %1164 = vmatprep.subr.mxu0 0.0
        %1165 = vmatpush1.msra.mxu0 0.0
        %1166 = vmatprep.subr.mxu0 0.0
        %1167 = vmatpush1.msra.mxu0 0.0
        %1168 = vmatprep.subr.mxu0 0.0
        %1169 = vmatpush1.msra.mxu0 0.0
        %1170 = vmatprep.subr.mxu0 0.0
        %1171 = vmatpush1.msra.mxu0 0.0
        %1172 = vmatprep.subr.mxu0 0.0
        %1173 = vmatpush1.msra.mxu0 0.0
        %1174 = vmatprep.subr.mxu0 0.0
        %1175 = vmatpush1.msra.mxu0 0.0
        %1176 = vmatprep.subr.mxu0 0.0
        %1177 = vmatpush1.msra.mxu0 0.0
        %1178 = vmatprep.subr.mxu0 0.0
        %1179 = vmatpush1.msra.mxu0 0.0
        %1180 = vmatprep.subr.mxu0 0.0
        %1181 = vmatpush1.msra.mxu0 0.0
        %1182 = vmatprep.subr.mxu0 0.0
        %1183 = vmatpush1.msra.mxu0 0.0
        %1184 = vmatprep.subr.mxu0 0.0
        %1185 = vmatpush1.msra.mxu0 0.0
        %1186 = vmatprep.subr.mxu0 0.0
        %1187 = vmatpush1.msra.mxu0 0.0
        %1188 = vmatprep.subr.mxu0 0.0
        %1189 = vmatpush1.msra.mxu0 0.0
        %1190 = vmatprep.subr.mxu0 0.0
        %1191 = vmatpush1.msra.mxu0 0.0
        %1192 = vmatprep.subr.mxu0 0.0
        %1193 = vmatpush1.msra.mxu0 0.0
        %1194 = vmatprep.subr.mxu0 0.0
        %1195 = vmatpush1.msra.mxu0 0.0
        %1196 = vmatprep.subr.mxu0 0.0
        %1197 = vmatpush1.msra.mxu0 0.0
        %1198 = vmatprep.subr.mxu0 0.0
        %1199 = vmatpush1.msra.mxu0 0.0
        %1200 = vmatprep.subr.mxu0 0.0
        %1201 = vmatpush1.msra.mxu0 0.0
        %1202 = vmatprep.subr.mxu0 0.0
        %1203 = vmatpush1.msra.mxu0 0.0
        %1204 = vmatprep.subr.mxu0 0.0
        %1205 = vmatpush1.msra.mxu0 0.0
        %1206 = vmatprep.subr.mxu0 0.0
        %1207 = vmatpush1.msra.mxu0 0.0
        %1208 = vmatprep.subr.mxu0 0.0
        %1209 = vmatpush1.msra.mxu0 0.0
        %1210 = vmatprep.subr.mxu0 0.0
        %1211 = vmatpush1.msra.mxu0 0.0
        %1212 = vmatprep.subr.mxu0 0.0
        %1213 = vmatpush1.msra.mxu0 0.0
        %1214 = vmatprep.subr.mxu0 0.0
        %1215 = vmatpush1.msra.mxu0 0.0
        %1216 = vmatprep.subr.mxu0 0.0
        %1217 = vmatpush1.msra.mxu0 0.0
        %1218 = vmatprep.subr.mxu0 0.0
        %1219 = vmatpush1.msra.mxu0 0.0
        %1220 = vmatprep.mubr.f32.mxu0 0.0
        %1221 = vmatmul.mubr.f32.gmra.mrb[0].mxu0 %v1154
        %v1222 = vpop.f32.mrb[0].mxu0
        %v1223 = vadd.f32 0.0, %v1222
        %v1224 = vpop.f32.mrb[0].mxu0
        %1225 = vdwg.mxu0
        %v1226 = vadd.f32 %v1145, %v1223
        %s1227 = scalar_lea.vmem %s3, 24
        %v1228 = vld [vmem:[%s1227] sm:$0xff]
        %1229 = vrot.lane.b32.xlu0 %v994, 118
        %v1230 = vpop.permute.xlu0 %1229
        %v1233 = vsel %vm1001, %v1228, 0
        %1235 = vmatprep.subr.mxu0 0.0
        %1236 = vmatpush1.msra.mxu0 %v1230
        %1237 = vmatprep.subr.mxu0 0.0
        %1238 = vmatpush1.msra.mxu0 0.0
        %1239 = vmatprep.subr.mxu0 0.0
        %1240 = vmatpush1.msra.mxu0 0.0
        %1241 = vmatprep.subr.mxu0 0.0
        %1242 = vmatpush1.msra.mxu0 0.0
        %1243 = vmatprep.subr.mxu0 0.0
        %1244 = vmatpush1.msra.mxu0 0.0
        %1245 = vmatprep.subr.mxu0 0.0
        %1246 = vmatpush1.msra.mxu0 0.0
        %1247 = vmatprep.subr.mxu0 0.0
        %1248 = vmatpush1.msra.mxu0 0.0
        %1249 = vmatprep.subr.mxu0 0.0
        %1250 = vmatpush1.msra.mxu0 0.0
        %1251 = vmatprep.subr.mxu0 0.0
        %1252 = vmatpush1.msra.mxu0 0.0
        %1253 = vmatprep.subr.mxu0 0.0
        %1254 = vmatpush1.msra.mxu0 0.0
        %1255 = vmatprep.subr.mxu0 0.0
        %1256 = vmatpush1.msra.mxu0 0.0
        %1257 = vmatprep.subr.mxu0 0.0
        %1258 = vmatpush1.msra.mxu0 0.0
        %1259 = vmatprep.subr.mxu0 0.0
        %1260 = vmatpush1.msra.mxu0 0.0
        %1261 = vmatprep.subr.mxu0 0.0
        %1262 = vmatpush1.msra.mxu0 0.0
        %1263 = vmatprep.subr.mxu0 0.0
        %1264 = vmatpush1.msra.mxu0 0.0
        %1265 = vmatprep.subr.mxu0 0.0
        %1266 = vmatpush1.msra.mxu0 0.0
        %1267 = vmatprep.subr.mxu0 0.0
        %1268 = vmatpush1.msra.mxu0 0.0
        %1269 = vmatprep.subr.mxu0 0.0
        %1270 = vmatpush1.msra.mxu0 0.0
        %1271 = vmatprep.subr.mxu0 0.0
        %1272 = vmatpush1.msra.mxu0 0.0
        %1273 = vmatprep.subr.mxu0 0.0
        %1274 = vmatpush1.msra.mxu0 0.0
        %1275 = vmatprep.subr.mxu0 0.0
        %1276 = vmatpush1.msra.mxu0 0.0
        %1277 = vmatprep.subr.mxu0 0.0
        %1278 = vmatpush1.msra.mxu0 0.0
        %1279 = vmatprep.subr.mxu0 0.0
        %1280 = vmatpush1.msra.mxu0 0.0
        %1281 = vmatprep.subr.mxu0 0.0
        %1282 = vmatpush1.msra.mxu0 0.0
        %1283 = vmatprep.subr.mxu0 0.0
        %1284 = vmatpush1.msra.mxu0 0.0
        %1285 = vmatprep.subr.mxu0 0.0
        %1286 = vmatpush1.msra.mxu0 0.0
        %1287 = vmatprep.subr.mxu0 0.0
        %1288 = vmatpush1.msra.mxu0 0.0
        %1289 = vmatprep.subr.mxu0 0.0
        %1290 = vmatpush1.msra.mxu0 0.0
        %1291 = vmatprep.subr.mxu0 0.0
        %1292 = vmatpush1.msra.mxu0 0.0
        %1293 = vmatprep.subr.mxu0 0.0
        %1294 = vmatpush1.msra.mxu0 0.0
        %1295 = vmatprep.subr.mxu0 0.0
        %1296 = vmatpush1.msra.mxu0 0.0
        %1297 = vmatprep.subr.mxu0 0.0
        %1298 = vmatpush1.msra.mxu0 0.0
        %1299 = vmatprep.mubr.f32.mxu0 0.0
        %1300 = vmatmul.mubr.f32.gmra.mrb[0].mxu0 %v1233
        %v1301 = vpop.f32.mrb[0].mxu0
        %v1302 = vadd.f32 0.0, %v1301
        %v1303 = vpop.f32.mrb[0].mxu0
        %1304 = vdwg.mxu0
        %v1305 = vadd.f32 %v1226, %v1302
        %s1306 = scalar_lea.vmem %s3, 32
        %v1307 = vld [vmem:[%s1306] sm:$0xff]
        %1308 = vrot.lane.b32.xlu0 %v994, 117
        %v1309 = vpop.permute.xlu0 %1308
        %v1312 = vsel %vm1001, %v1307, 0
        %1314 = vmatprep.subr.mxu0 0.0
        %1315 = vmatpush1.msra.mxu0 %v1309
        %1316 = vmatprep.subr.mxu0 0.0
        %1317 = vmatpush1.msra.mxu0 0.0
        %1318 = vmatprep.subr.mxu0 0.0
        %1319 = vmatpush1.msra.mxu0 0.0
        %1320 = vmatprep.subr.mxu0 0.0
        %1321 = vmatpush1.msra.mxu0 0.0
        %1322 = vmatprep.subr.mxu0 0.0
        %1323 = vmatpush1.msra.mxu0 0.0
        %1324 = vmatprep.subr.mxu0 0.0
        %1325 = vmatpush1.msra.mxu0 0.0
        %1326 = vmatprep.subr.mxu0 0.0
        %1327 = vmatpush1.msra.mxu0 0.0
        %1328 = vmatprep.subr.mxu0 0.0
        %1329 = vmatpush1.msra.mxu0 0.0
        %1330 = vmatprep.subr.mxu0 0.0
        %1331 = vmatpush1.msra.mxu0 0.0
        %1332 = vmatprep.subr.mxu0 0.0
        %1333 = vmatpush1.msra.mxu0 0.0
        %1334 = vmatprep.subr.mxu0 0.0
        %1335 = vmatpush1.msra.mxu0 0.0
        %1336 = vmatprep.subr.mxu0 0.0
        %1337 = vmatpush1.msra.mxu0 0.0
        %1338 = vmatprep.subr.mxu0 0.0
        %1339 = vmatpush1.msra.mxu0 0.0
        %1340 = vmatprep.subr.mxu0 0.0
        %1341 = vmatpush1.msra.mxu0 0.0
        %1342 = vmatprep.subr.mxu0 0.0
        %1343 = vmatpush1.msra.mxu0 0.0
        %1344 = vmatprep.subr.mxu0 0.0
        %1345 = vmatpush1.msra.mxu0 0.0
        %1346 = vmatprep.subr.mxu0 0.0
        %1347 = vmatpush1.msra.mxu0 0.0
        %1348 = vmatprep.subr.mxu0 0.0
        %1349 = vmatpush1.msra.mxu0 0.0
        %1350 = vmatprep.subr.mxu0 0.0
        %1351 = vmatpush1.msra.mxu0 0.0
        %1352 = vmatprep.subr.mxu0 0.0
        %1353 = vmatpush1.msra.mxu0 0.0
        %1354 = vmatprep.subr.mxu0 0.0
        %1355 = vmatpush1.msra.mxu0 0.0
        %1356 = vmatprep.subr.mxu0 0.0
        %1357 = vmatpush1.msra.mxu0 0.0
        %1358 = vmatprep.subr.mxu0 0.0
        %1359 = vmatpush1.msra.mxu0 0.0
        %1360 = vmatprep.subr.mxu0 0.0
        %1361 = vmatpush1.msra.mxu0 0.0
        %1362 = vmatprep.subr.mxu0 0.0
        %1363 = vmatpush1.msra.mxu0 0.0
        %1364 = vmatprep.subr.mxu0 0.0
        %1365 = vmatpush1.msra.mxu0 0.0
        %1366 = vmatprep.subr.mxu0 0.0
        %1367 = vmatpush1.msra.mxu0 0.0
        %1368 = vmatprep.subr.mxu0 0.0
        %1369 = vmatpush1.msra.mxu0 0.0
        %1370 = vmatprep.subr.mxu0 0.0
        %1371 = vmatpush1.msra.mxu0 0.0
        %1372 = vmatprep.subr.mxu0 0.0
        %1373 = vmatpush1.msra.mxu0 0.0
        %1374 = vmatprep.subr.mxu0 0.0
        %1375 = vmatpush1.msra.mxu0 0.0
        %1376 = vmatprep.subr.mxu0 0.0
        %1377 = vmatpush1.msra.mxu0 0.0
        %1378 = vmatprep.mubr.f32.mxu0 0.0
        %1379 = vmatmul.mubr.f32.gmra.mrb[0].mxu0 %v1312
        %v1380 = vpop.f32.mrb[0].mxu0
        %v1381 = vadd.f32 0.0, %v1380
        %v1382 = vpop.f32.mrb[0].mxu0
        %1383 = vdwg.mxu0
        %v1384 = vadd.f32 %v1305, %v1381
        %s1385 = scalar_lea.vmem %s3, 40
        %v1386 = vld [vmem:[%s1385] sm:$0xff]
        %1387 = vrot.lane.b32.xlu0 %v994, 116
        %v1388 = vpop.permute.xlu0 %1387
        %v1391 = vsel %vm1001, %v1386, 0
        %1393 = vmatprep.subr.mxu0 0.0
        %1394 = vmatpush1.msra.mxu0 %v1388
        %1395 = vmatprep.subr.mxu0 0.0
        %1396 = vmatpush1.msra.mxu0 0.0
        %1397 = vmatprep.subr.mxu0 0.0
        %1398 = vmatpush1.msra.mxu0 0.0
        %1399 = vmatprep.subr.mxu0 0.0
        %1400 = vmatpush1.msra.mxu0 0.0
        %1401 = vmatprep.subr.mxu0 0.0
        %1402 = vmatpush1.msra.mxu0 0.0
        %1403 = vmatprep.subr.mxu0 0.0
        %1404 = vmatpush1.msra.mxu0 0.0
        %1405 = vmatprep.subr.mxu0 0.0
        %1406 = vmatpush1.msra.mxu0 0.0
        %1407 = vmatprep.subr.mxu0 0.0
        %1408 = vmatpush1.msra.mxu0 0.0
        %1409 = vmatprep.subr.mxu0 0.0
        %1410 = vmatpush1.msra.mxu0 0.0
        %1411 = vmatprep.subr.mxu0 0.0
        %1412 = vmatpush1.msra.mxu0 0.0
        %1413 = vmatprep.subr.mxu0 0.0
        %1414 = vmatpush1.msra.mxu0 0.0
        %1415 = vmatprep.subr.mxu0 0.0
        %1416 = vmatpush1.msra.mxu0 0.0
        %1417 = vmatprep.subr.mxu0 0.0
        %1418 = vmatpush1.msra.mxu0 0.0
        %1419 = vmatprep.subr.mxu0 0.0
        %1420 = vmatpush1.msra.mxu0 0.0
        %1421 = vmatprep.subr.mxu0 0.0
        %1422 = vmatpush1.msra.mxu0 0.0
        %1423 = vmatprep.subr.mxu0 0.0
        %1424 = vmatpush1.msra.mxu0 0.0
        %1425 = vmatprep.subr.mxu0 0.0
        %1426 = vmatpush1.msra.mxu0 0.0
        %1427 = vmatprep.subr.mxu0 0.0
        %1428 = vmatpush1.msra.mxu0 0.0
        %1429 = vmatprep.subr.mxu0 0.0
        %1430 = vmatpush1.msra.mxu0 0.0
        %1431 = vmatprep.subr.mxu0 0.0
        %1432 = vmatpush1.msra.mxu0 0.0
        %1433 = vmatprep.subr.mxu0 0.0
        %1434 = vmatpush1.msra.mxu0 0.0
        %1435 = vmatprep.subr.mxu0 0.0
        %1436 = vmatpush1.msra.mxu0 0.0
        %1437 = vmatprep.subr.mxu0 0.0
        %1438 = vmatpush1.msra.mxu0 0.0
        %1439 = vmatprep.subr.mxu0 0.0
        %1440 = vmatpush1.msra.mxu0 0.0
        %1441 = vmatprep.subr.mxu0 0.0
        %1442 = vmatpush1.msra.mxu0 0.0
        %1443 = vmatprep.subr.mxu0 0.0
        %1444 = vmatpush1.msra.mxu0 0.0
        %1445 = vmatprep.subr.mxu0 0.0
        %1446 = vmatpush1.msra.mxu0 0.0
        %1447 = vmatprep.subr.mxu0 0.0
        %1448 = vmatpush1.msra.mxu0 0.0
        %1449 = vmatprep.subr.mxu0 0.0
        %1450 = vmatpush1.msra.mxu0 0.0
        %1451 = vmatprep.subr.mxu0 0.0
        %1452 = vmatpush1.msra.mxu0 0.0
        %1453 = vmatprep.subr.mxu0 0.0
        %1454 = vmatpush1.msra.mxu0 0.0
        %1455 = vmatprep.subr.mxu0 0.0
        %1456 = vmatpush1.msra.mxu0 0.0
        %1457 = vmatprep.mubr.f32.mxu0 0.0
        %1458 = vmatmul.mubr.f32.gmra.mrb[0].mxu0 %v1391
        %v1459 = vpop.f32.mrb[0].mxu0
        %v1460 = vadd.f32 0.0, %v1459
        %v1461 = vpop.f32.mrb[0].mxu0
        %1462 = vdwg.mxu0
        %v1463 = vadd.f32 %v1384, %v1460
        %s1464 = scalar_lea.vmem %s3, 48
        %v1465 = vld [vmem:[%s1464] sm:$0xff]
        %1466 = vrot.lane.b32.xlu0 %v994, 108
        %v1467 = vpop.permute.xlu0 %1466
        %v1470 = vsel %vm1001, %v1465, 0
        %1472 = vmatprep.subr.mxu0 0.0
        %1473 = vmatpush1.msra.mxu0 %v1467
        %1474 = vmatprep.subr.mxu0 0.0
        %1475 = vmatpush1.msra.mxu0 0.0
        %1476 = vmatprep.subr.mxu0 0.0
        %1477 = vmatpush1.msra.mxu0 0.0
        %1478 = vmatprep.subr.mxu0 0.0
        %1479 = vmatpush1.msra.mxu0 0.0
        %1480 = vmatprep.subr.mxu0 0.0
        %1481 = vmatpush1.msra.mxu0 0.0
        %1482 = vmatprep.subr.mxu0 0.0
        %1483 = vmatpush1.msra.mxu0 0.0
        %1484 = vmatprep.subr.mxu0 0.0
        %1485 = vmatpush1.msra.mxu0 0.0
        %1486 = vmatprep.subr.mxu0 0.0
        %1487 = vmatpush1.msra.mxu0 0.0
        %1488 = vmatprep.subr.mxu0 0.0
        %1489 = vmatpush1.msra.mxu0 0.0
        %1490 = vmatprep.subr.mxu0 0.0
        %1491 = vmatpush1.msra.mxu0 0.0
        %1492 = vmatprep.subr.mxu0 0.0
        %1493 = vmatpush1.msra.mxu0 0.0
        %1494 = vmatprep.subr.mxu0 0.0
        %1495 = vmatpush1.msra.mxu0 0.0
        %1496 = vmatprep.subr.mxu0 0.0
        %1497 = vmatpush1.msra.mxu0 0.0
        %1498 = vmatprep.subr.mxu0 0.0
        %1499 = vmatpush1.msra.mxu0 0.0
        %1500 = vmatprep.subr.mxu0 0.0
        %1501 = vmatpush1.msra.mxu0 0.0
        %1502 = vmatprep.subr.mxu0 0.0
        %1503 = vmatpush1.msra.mxu0 0.0
        %1504 = vmatprep.subr.mxu0 0.0
        %1505 = vmatpush1.msra.mxu0 0.0
        %1506 = vmatprep.subr.mxu0 0.0
        %1507 = vmatpush1.msra.mxu0 0.0
        %1508 = vmatprep.subr.mxu0 0.0
        %1509 = vmatpush1.msra.mxu0 0.0
        %1510 = vmatprep.subr.mxu0 0.0
        %1511 = vmatpush1.msra.mxu0 0.0
        %1512 = vmatprep.subr.mxu0 0.0
        %1513 = vmatpush1.msra.mxu0 0.0
        %1514 = vmatprep.subr.mxu0 0.0
        %1515 = vmatpush1.msra.mxu0 0.0
        %1516 = vmatprep.subr.mxu0 0.0
        %1517 = vmatpush1.msra.mxu0 0.0
        %1518 = vmatprep.subr.mxu0 0.0
        %1519 = vmatpush1.msra.mxu0 0.0
        %1520 = vmatprep.subr.mxu0 0.0
        %1521 = vmatpush1.msra.mxu0 0.0
        %1522 = vmatprep.subr.mxu0 0.0
        %1523 = vmatpush1.msra.mxu0 0.0
        %1524 = vmatprep.subr.mxu0 0.0
        %1525 = vmatpush1.msra.mxu0 0.0
        %1526 = vmatprep.subr.mxu0 0.0
        %1527 = vmatpush1.msra.mxu0 0.0
        %1528 = vmatprep.subr.mxu0 0.0
        %1529 = vmatpush1.msra.mxu0 0.0
        %1530 = vmatprep.subr.mxu0 0.0
        %1531 = vmatpush1.msra.mxu0 0.0
        %1532 = vmatprep.subr.mxu0 0.0
        %1533 = vmatpush1.msra.mxu0 0.0
        %1534 = vmatprep.subr.mxu0 0.0
        %1535 = vmatpush1.msra.mxu0 0.0
        %1536 = vmatprep.mubr.f32.mxu0 0.0
        %1537 = vmatmul.mubr.f32.gmra.mrb[0].mxu0 %v1470
        %v1538 = vpop.f32.mrb[0].mxu0
        %v1539 = vadd.f32 0.0, %v1538
        %v1540 = vpop.f32.mrb[0].mxu0
        %1541 = vdwg.mxu0
        %v1542 = vadd.f32 %v1463, %v1539
        %s1543 = scalar_lea.vmem %s3, 56
        %v1544 = vld [vmem:[%s1543] sm:$0xff]
        %1545 = vrot.lane.b32.xlu0 %v994, 107
        %v1546 = vpop.permute.xlu0 %1545
        %v1549 = vsel %vm1001, %v1544, 0
        %1551 = vmatprep.subr.mxu0 0.0
        %1552 = vmatpush1.msra.mxu0 %v1546
        %1553 = vmatprep.subr.mxu0 0.0
        %1554 = vmatpush1.msra.mxu0 0.0
        %1555 = vmatprep.subr.mxu0 0.0
        %1556 = vmatpush1.msra.mxu0 0.0
        %1557 = vmatprep.subr.mxu0 0.0
        %1558 = vmatpush1.msra.mxu0 0.0
        %1559 = vmatprep.subr.mxu0 0.0
        %1560 = vmatpush1.msra.mxu0 0.0
        %1561 = vmatprep.subr.mxu0 0.0
        %1562 = vmatpush1.msra.mxu0 0.0
        %1563 = vmatprep.subr.mxu0 0.0
        %1564 = vmatpush1.msra.mxu0 0.0
        %1565 = vmatprep.subr.mxu0 0.0
        %1566 = vmatpush1.msra.mxu0 0.0
        %1567 = vmatprep.subr.mxu0 0.0
        %1568 = vmatpush1.msra.mxu0 0.0
        %1569 = vmatprep.subr.mxu0 0.0
        %1570 = vmatpush1.msra.mxu0 0.0
        %1571 = vmatprep.subr.mxu0 0.0
        %1572 = vmatpush1.msra.mxu0 0.0
        %1573 = vmatprep.subr.mxu0 0.0
        %1574 = vmatpush1.msra.mxu0 0.0
        %1575 = vmatprep.subr.mxu0 0.0
        %1576 = vmatpush1.msra.mxu0 0.0
        %1577 = vmatprep.subr.mxu0 0.0
        %1578 = vmatpush1.msra.mxu0 0.0
        %1579 = vmatprep.subr.mxu0 0.0
        %1580 = vmatpush1.msra.mxu0 0.0
        %1581 = vmatprep.subr.mxu0 0.0
        %1582 = vmatpush1.msra.mxu0 0.0
        %1583 = vmatprep.subr.mxu0 0.0
        %1584 = vmatpush1.msra.mxu0 0.0
        %1585 = vmatprep.subr.mxu0 0.0
        %1586 = vmatpush1.msra.mxu0 0.0
        %1587 = vmatprep.subr.mxu0 0.0
        %1588 = vmatpush1.msra.mxu0 0.0
        %1589 = vmatprep.subr.mxu0 0.0
        %1590 = vmatpush1.msra.mxu0 0.0
        %1591 = vmatprep.subr.mxu0 0.0
        %1592 = vmatpush1.msra.mxu0 0.0
        %1593 = vmatprep.subr.mxu0 0.0
        %1594 = vmatpush1.msra.mxu0 0.0
        %1595 = vmatprep.subr.mxu0 0.0
        %1596 = vmatpush1.msra.mxu0 0.0
        %1597 = vmatprep.subr.mxu0 0.0
        %1598 = vmatpush1.msra.mxu0 0.0
        %1599 = vmatprep.subr.mxu0 0.0
        %1600 = vmatpush1.msra.mxu0 0.0
        %1601 = vmatprep.subr.mxu0 0.0
        %1602 = vmatpush1.msra.mxu0 0.0
        %1603 = vmatprep.subr.mxu0 0.0
        %1604 = vmatpush1.msra.mxu0 0.0
        %1605 = vmatprep.subr.mxu0 0.0
        %1606 = vmatpush1.msra.mxu0 0.0
        %1607 = vmatprep.subr.mxu0 0.0
        %1608 = vmatpush1.msra.mxu0 0.0
        %1609 = vmatprep.subr.mxu0 0.0
        %1610 = vmatpush1.msra.mxu0 0.0
        %1611 = vmatprep.subr.mxu0 0.0
        %1612 = vmatpush1.msra.mxu0 0.0
        %1613 = vmatprep.subr.mxu0 0.0
        %1614 = vmatpush1.msra.mxu0 0.0
        %1615 = vmatprep.mubr.f32.mxu0 0.0
        %1616 = vmatmul.mubr.f32.gmra.mrb[0].mxu0 %v1549
        %v1617 = vpop.f32.mrb[0].mxu0
        %v1618 = vadd.f32 0.0, %v1617
        %v1619 = vpop.f32.mrb[0].mxu0
        %1620 = vdwg.mxu0
        %v1621 = vadd.f32 %v1542, %v1618
        %s1622 = scalar_lea.vmem %s3, 64
        %v1623 = vld [vmem:[%s1622] sm:$0xff]
        %1624 = vrot.lane.b32.xlu0 %v994, 106
        %v1625 = vpop.permute.xlu0 %1624
        %v1628 = vsel %vm1001, %v1623, 0
        %1630 = vmatprep.subr.mxu0 0.0
        %1631 = vmatpush1.msra.mxu0 %v1625
        %1632 = vmatprep.subr.mxu0 0.0
        %1633 = vmatpush1.msra.mxu0 0.0
        %1634 = vmatprep.subr.mxu0 0.0
        %1635 = vmatpush1.msra.mxu0 0.0
        %1636 = vmatprep.subr.mxu0 0.0
        %1637 = vmatpush1.msra.mxu0 0.0
        %1638 = vmatprep.subr.mxu0 0.0
        %1639 = vmatpush1.msra.mxu0 0.0
        %1640 = vmatprep.subr.mxu0 0.0
        %1641 = vmatpush1.msra.mxu0 0.0
        %1642 = vmatprep.subr.mxu0 0.0
        %1643 = vmatpush1.msra.mxu0 0.0
        %1644 = vmatprep.subr.mxu0 0.0
        %1645 = vmatpush1.msra.mxu0 0.0
        %1646 = vmatprep.subr.mxu0 0.0
        %1647 = vmatpush1.msra.mxu0 0.0
        %1648 = vmatprep.subr.mxu0 0.0
        %1649 = vmatpush1.msra.mxu0 0.0
        %1650 = vmatprep.subr.mxu0 0.0
        %1651 = vmatpush1.msra.mxu0 0.0
        %1652 = vmatprep.subr.mxu0 0.0
        %1653 = vmatpush1.msra.mxu0 0.0
        %1654 = vmatprep.subr.mxu0 0.0
        %1655 = vmatpush1.msra.mxu0 0.0
        %1656 = vmatprep.subr.mxu0 0.0
        %1657 = vmatpush1.msra.mxu0 0.0
        %1658 = vmatprep.subr.mxu0 0.0
        %1659 = vmatpush1.msra.mxu0 0.0
        %1660 = vmatprep.subr.mxu0 0.0
        %1661 = vmatpush1.msra.mxu0 0.0
        %1662 = vmatprep.subr.mxu0 0.0
        %1663 = vmatpush1.msra.mxu0 0.0
        %1664 = vmatprep.subr.mxu0 0.0
        %1665 = vmatpush1.msra.mxu0 0.0
        %1666 = vmatprep.subr.mxu0 0.0
        %1667 = vmatpush1.msra.mxu0 0.0
        %1668 = vmatprep.subr.mxu0 0.0
        %1669 = vmatpush1.msra.mxu0 0.0
        %1670 = vmatprep.subr.mxu0 0.0
        %1671 = vmatpush1.msra.mxu0 0.0
        %1672 = vmatprep.subr.mxu0 0.0
        %1673 = vmatpush1.msra.mxu0 0.0
        %1674 = vmatprep.subr.mxu0 0.0
        %1675 = vmatpush1.msra.mxu0 0.0
        %1676 = vmatprep.subr.mxu0 0.0
        %1677 = vmatpush1.msra.mxu0 0.0
        %1678 = vmatprep.subr.mxu0 0.0
        %1679 = vmatpush1.msra.mxu0 0.0
        %1680 = vmatprep.subr.mxu0 0.0
        %1681 = vmatpush1.msra.mxu0 0.0
        %1682 = vmatprep.subr.mxu0 0.0
        %1683 = vmatpush1.msra.mxu0 0.0
        %1684 = vmatprep.subr.mxu0 0.0
        %1685 = vmatpush1.msra.mxu0 0.0
        %1686 = vmatprep.subr.mxu0 0.0
        %1687 = vmatpush1.msra.mxu0 0.0
        %1688 = vmatprep.subr.mxu0 0.0
        %1689 = vmatpush1.msra.mxu0 0.0
        %1690 = vmatprep.subr.mxu0 0.0
        %1691 = vmatpush1.msra.mxu0 0.0
        %1692 = vmatprep.subr.mxu0 0.0
        %1693 = vmatpush1.msra.mxu0 0.0
        %1694 = vmatprep.mubr.f32.mxu0 0.0
        %1695 = vmatmul.mubr.f32.gmra.mrb[0].mxu0 %v1628
        %v1696 = vpop.f32.mrb[0].mxu0
        %v1697 = vadd.f32 0.0, %v1696
        %v1698 = vpop.f32.mrb[0].mxu0
        %1699 = vdwg.mxu0
        %v1700 = vadd.f32 %v1621, %v1697
        %v1701 = vld [vmem:[%s4] sm:$0xff]
        %1703 = vset.pattern.permute.xlu0 0
        %1704 = vperm.xlu0 %1703, %v1701
        %v1705 = vpop.permute.xlu0 %1704
        %v1707 = vadd.f32 %v1700, %v1705
        %v1708 = vmul.f32 %v1707, 0.01
        %v1709 = vmax.f32 %v1707, %v1708
        %1710 = vst.msk [vmem:[%s242] sm:$0xff] %vm1001, %v1709
        %1712 = vrot.lane.b32.xlu0 %v1709, 126
        %v1713 = vpop.permute.xlu0 %1712
        %vm1715 = vcmask 130112
        %1716 = vst.msk [vmem:[%s242] sm:$0xff] %vm1715, %v1713
        %1717 = vrot.lane.b32.xlu0 %v1709, 124
        %v1718 = vpop.permute.xlu0 %1717
        %vm1720 = vcmask 195712
        %1721 = vst.msk [vmem:[%s242] sm:$0xff] %vm1720, %v1718
        %1722 = vrot.lane.b32.xlu0 %v1709, 122
        %v1723 = vpop.permute.xlu0 %1722
        %vm1725 = vcmask 261312
        %1726 = vst.msk [vmem:[%s242] sm:$0xff] %vm1725, %v1723
        %1727 = vrot.lane.b32.xlu0 %v1709, 120
        %v1728 = vpop.permute.xlu0 %1727
        %vm1730 = vcmask 326912
        %1731 = vst.msk [vmem:[%s242] sm:$0xff] %vm1730, %v1728
        %1732 = vrot.lane.b32.xlu0 %v1709, 118
        %v1733 = vpop.permute.xlu0 %1732
        %vm1735 = vcmask 392512
        %1736 = vst.msk [vmem:[%s242] sm:$0xff] %vm1735, %v1733
        %1737 = vrot.lane.b32.xlu0 %v1709, 116
        %v1738 = vpop.permute.xlu0 %1737
        %vm1740 = vcmask 458112
        %1741 = vst.msk [vmem:[%s242] sm:$0xff] %vm1740, %v1738
        %1742 = vrot.lane.b32.xlu0 %v1709, 114
        %v1743 = vpop.permute.xlu0 %1742
        %vm1745 = vcmask 523712
        %1746 = vst.msk [vmem:[%s242] sm:$0xff] %vm1745, %v1743
        %s1747 = sand.u32 %s159, 1
        %s1748 = scalar_lea.sflag [#allocation4], %s1747
        %s1749 = sand.u32 %s159, 1
        %s1750 = smul.addr %s1749, 8
        %s1751 = scalar_lea.vmem [#allocation3], %s1750
        // Predicated region
        $region45: #{tpu_custom_call.1} parent=43 // pred_check
          %p1752 = pneg %p169
        $region46: #{tpu_custom_call.1} parent=43 // pred_check_branch
          %1754 = sbr.rel (%p1752) target = $region48
        $region47: #{tpu_custom_call.1} parent=43 // pred_region
          %s1756 = ssub.s32 128, 128
          %1757 = vsyncadd %s1748, %s1756
          %s1758 = smul.addr %s20, 128
          %s1759 = scalar_lea.hbm %s6, %s1758
          %s1761 = sshll.u32 %s1751, 4
          %s1762 = int_to_ptr.vmem [resolvable:$true] %s1761
          %1764 = dma.vmem_to_hbm [thread:$0]  %s1762, 128, %s1759, %s1748
        $region48: #{tpu_custom_call.1} parent=43 // pred_fallthru
          _
      $region44: #{tpu_custom_call.1} parent=5 // pred_fallthru
        _
      %p1765 = scmp.le.s32.totalorder 2, %s15
      // Predicated region
      $region49: #{tpu_custom_call.1} parent=5 // pred_check
        %p1766 = pneg %p1765
      $region50: #{tpu_custom_call.1} parent=5 // pred_check_branch
        %1768 = sbr.rel (%p1766) target = $region52
      $region51: #{tpu_custom_call.1} parent=5 // pred_region
        %s1769 = ssub.s32 %s15, 2
        // Predicated region
        $region53: #{tpu_custom_call.1} parent=51 // pred_check
          %p1770 = pneg %p175
        $region54: #{tpu_custom_call.1} parent=51 // pred_check_branch
          %1772 = sbr.rel (%p1770) target = $region56
        $region55: #{tpu_custom_call.1} parent=51 // pred_region
          %s1773 = sand.u32 %s160, 1
          %s1774 = scalar_lea.sflag [#allocation4], %s1773
          %s1775 = sand.u32 %s160, 1
          %s1776 = smul.addr %s1775, 8
          %s1777 = scalar_lea.vmem [#allocation3], %s1776
          %1778 = dma.done %s1774, 128
        $region56: #{tpu_custom_call.1} parent=51 // pred_fallthru
          _
      $region52: #{tpu_custom_call.1} parent=5 // pred_fallthru
        _
    $region6: #{tpu_custom_call.1} parent=1 // loop_footer
      %s19 = sadd.s32 1, %s15
    $region7: #{tpu_custom_call.1} parent=1 // loop_footer_branch
      %14 = sbr.rel target = $region3
    $region8: #{tpu_custom_call.1} parent=1 // loop_exit
      _
    %1779 = vsyncpa [#allocation4], 1
    %s1780 = scalar_lea.sflag [#allocation4], 1
    %1781 = vsyncpa %s1780, 1

</llo_original>
